<compile_context>
chip_gen: v6e
topology: v6e:2x2x1
jax: 0.10.0
libtpu: 0.0.40
codegen_flags: <defaults>
</compile_context>

<pallas_src>
import numpy as np
import jax
import jax.numpy as jnp
from jax import lax
from jax.experimental import pallas as pl
from jax.experimental.pallas import tpu as pltpu

RESERVOIR_SIZE = 32   # R
INPUT_SIZE = 4        # I
SPECTRAL_RADIUS = 1.0
CONNECTIVITY_RATE = 1.0

BATCH = 128           # independent sequences along the lane dimension
SEQ_LEN = 8           # timesteps handled inside one pallas_call


def _esn_rollout_kernel(w_in_ref, w_res_ref, x_ref, states_ref, pre_scr):
    """Whole T-step recurrence in ONE invocation (no per-step grid overhead).

    Refs:
      w_in_ref:   (R, I)      folded input-column weights   (VMEM, constant)
      w_res_ref:  (R, R)      folded reservoir weights      (VMEM, constant)
      x_ref:      (I, T*B)    all inputs, lane-dense        (VMEM)
      states_ref: (T, R, B)   state after each step         (VMEM output)
      pre_scr:    (R, T*B)    scratch for the hoisted input projection
    """
    T, R, B = states_ref.shape

    # Recurrence-free input projection for ALL timesteps in one MXU pass,
    # hoisted off the serial dependency chain.
    pre_scr[...] = jnp.dot(w_in_ref[...], x_ref[...],
                           preferred_element_type=jnp.float32)   # (R, T*B)

    def step(t, state):
        off = pl.multiple_of(t * B, B)                 # 128-lane aligned slice
        pre_t = pre_scr[:, pl.ds(off, B)]              # (R, B)
        new_state = jnp.tanh(
            pre_t + jnp.dot(w_res_ref[...], state,
                            preferred_element_type=jnp.float32))  # (R, B)
        states_ref[t] = new_state                      # all_states[t + 1]
        return new_state

    # self.state starts at zeros.  Short fixed trip-count -> fully unrolled
    # so the LLO scheduler sees the whole chain.
    lax.fori_loop(0, T, step, jnp.zeros((R, B), jnp.float32), unroll=True)


def esn_rollout(w_in_eff, w_res_eff, x_seq):
    """Run T recurrent steps for B independent sequences in one pallas_call.

    Args:
      w_in_eff:  (R, I)    float32, input columns of folded U*S*Vh.
      w_res_eff: (R, R)    float32, reservoir columns of folded U*S*Vh.
      x_seq:     (T, I, B) float32, per-step inputs (B sequences).
    Returns:
      states: (T, R, B) float32 — state after each step (all_states[1:]).
    """
    T, I, B = x_seq.shape
    R = w_res_eff.shape[0]

    # Layout plumbing (wrapper-side, not compute): present the inputs as a
    # lane-dense (I, T*B) slab so the input projection is a single batched
    # matmul inside the kernel.
    x_flat = jnp.transpose(x_seq, (1, 0, 2)).reshape(I, T * B)

    # Total resident footprint ~ (I + 2*R) * T*B * 4B + weights ~= 0.3 MiB;
    # far below the scoped-VMEM limit on v5e/v6e/v7x.  For much larger T,
    # chunk the time axis (per-generation chunk size) instead of one block.
    return pl.pallas_call(
        _esn_rollout_kernel,
        out_shape=jax.ShapeDtypeStruct((T, R, B), jnp.float32),
        grid_spec=pltpu.PrefetchScalarGridSpec(
            num_scalar_prefetch=0,
            grid=(1,),   # single invocation; recurrence is an in-kernel loop
            in_specs=[
                pl.BlockSpec((R, I), lambda i: (0, 0)),
                pl.BlockSpec((R, R), lambda i: (0, 0)),
                pl.BlockSpec((I, T * B), lambda i: (0, 0)),
            ],
            out_specs=pl.BlockSpec((T, R, B), lambda i: (0, 0, 0)),
            scratch_shapes=[pltpu.VMEM((R, T * B), jnp.float32)],
        ),
        compiler_params=pltpu.CompilerParams(
            dimension_semantics=("arbitrary",)),
    )(w_in_eff, w_res_eff, x_flat)


def module_outputs(states, x_seq):
    """Reassemble the PyTorch module's per-step output cat([state, input])."""
    return jnp.concatenate([states, x_seq], axis=1)   # (T, R+I, B)


# ----------------------- deterministic parameter setup -----------------------

def _simple_reservoir_matrix(rng, size_i, size_j, connectivity_rate,
                             spectral_radius):
    W_res = rng.random((size_i, size_j)).astype(np.float32)
    mask = rng.random((size_i, size_j)) > connectivity_rate
    W_res[mask] = 0.0
    current_sr = np.max(np.abs(np.linalg.eigvals(W_res)))
    W_res = W_res * (spectral_radius / current_sr)
    total = size_i * size_j
    neg_idx = rng.choice(total, total // 2, replace=False)
    W_flat = W_res.flatten()
    W_flat[neg_idx] *= -1.0
    return W_flat.reshape(size_i, size_j).astype(np.float32)


def build_esn_params():
    rng = np.random.default_rng(0)
    R, I = RESERVOIR_SIZE, INPUT_SIZE
    W_in = (rng.random((R, I)).astype(np.float32) * 2.0 - 1.0)
    W_res = _simple_reservoir_matrix(rng, R, R, CONNECTIVITY_RATE,
                                     SPECTRAL_RADIUS)
    W = np.hstack([W_in, W_res]).astype(np.float32)            # (R, I + R)
    # Reduced SVD (see NOTE at top), then fold U @ diag(S) @ Vh offline.
    U, S, Vh = np.linalg.svd(W, full_matrices=False)           # (R,R),(R,),(R,I+R)
    W_eff = ((U * S[None, :]) @ Vh).astype(np.float32)         # (R, I + R)
    w_in_eff = jnp.asarray(W_eff[:, :I], dtype=jnp.float32)    # (R, I)
    w_res_eff = jnp.asarray(W_eff[:, I:], dtype=jnp.float32)   # (R, R)
    svd_factors = (jnp.asarray(U, jnp.float32),
                   jnp.asarray(S, jnp.float32),
                   jnp.asarray(Vh, jnp.float32))
    return w_in_eff, w_res_eff, svd_factors


# --------------------------- pure-JAX references -----------------------------

def reference_rollout_folded(w_in_eff, w_res_eff, x_seq):
    """Same folded/split formulation as the kernel (tight comparison)."""
    T, _, B = x_seq.shape
    R = w_res_eff.shape[0]
    state = jnp.zeros((R, B), dtype=jnp.float32)
    states = []
    for t in range(T):
        pre = (jnp.dot(w_in_eff, x_seq[t], preferred_element_type=jnp.float32)
               + jnp.dot(w_res_eff, state, preferred_element_type=jnp.float32))
        state = jnp.tanh(pre)
        states.append(state)
    return jnp.stack(states, axis=0)


def reference_rollout_original(U, S, Vh, x_seq):
    """Original module path: tanh(U @ diag(S) @ Vh @ [x; state]) per step.

    Catches errors in the offline fold / column split.
    """
    T, _, B = x_seq.shape
    R = U.shape[0]
    state = jnp.zeros((R, B), dtype=jnp.float32)
    states = []
    for t in range(T):
        z = jnp.concatenate([x_seq[t], state], axis=0)          # (I+R, B)
        state = jnp.tanh(U @ (S[:, None] * (Vh @ z)))
        states.append(state)
    return jnp.stack(states, axis=0)


if __name__ == "__main__":
    R, I, B, T = RESERVOIR_SIZE, INPUT_SIZE, BATCH, SEQ_LEN
    w_in_eff, w_res_eff, (U, S, Vh) = build_esn_params()

    key = jax.random.PRNGKey(0)
    x_seq = jax.random.normal(key, (T, I, B), dtype=jnp.float32)

    # Single kernel launch covers the whole T-step recurrence for B sequences.
    states = esn_rollout(w_in_eff, w_res_eff, x_seq)
    states = jax.block_until_ready(states)

    # Check 1: against the folded/split formulation (same math as the kernel).
    ref_folded = reference_rollout_folded(w_in_eff, w_res_eff, x_seq)
    np.testing.assert_allclose(np.asarray(states), np.asarray(ref_folded),
                               rtol=1e-5, atol=1e-5)

    # Check 2: against the original three-matmul [x; state] path (validates
    # the offline U @ diag(S) @ Vh fold and the column split).
    ref_orig = reference_rollout_original(U, S, Vh, x_seq)
    np.testing.assert_allclose(np.asarray(states), np.asarray(ref_orig),
                               rtol=1e-4, atol=1e-4)

    # Module-style per-step outputs: cat([state, input], dim=0) per column.
    outputs = module_outputs(states, x_seq)
    assert states.shape == (T, R, B)
    assert outputs.shape == (T, R + I, B)
    print("KERNEL_OK")
</pallas_src>

<mosaic_0001>
module attributes {stable_mosaic.version = 11 : i64} {
  func.func @_esn_rollout_kernel(%arg0: i32, %arg1: memref<32x4xf32, #tpu.memory_space<vmem>>, %arg2: memref<32x32xf32, #tpu.memory_space<vmem>>, %arg3: memref<4x1024xf32, #tpu.memory_space<vmem>>, %arg4: memref<8x32x128xf32, #tpu.memory_space<vmem>>, %arg5: memref<32x1024xf32, #tpu.memory_space<vmem>>) attributes {dimension_semantics = [#tpu.dimension_semantics<arbitrary>], iteration_bounds = array<i64: 1>, scalar_prefetch = 0 : i64, scratch_operands = 1 : i64, tpu.core_type = #tpu.core_type<tc>, window_params = [{pipeline_mode = #tpu.pipeline_mode<synchronous>, transform_indices = @transform_0, window_bounds = array<i64: 32, 4>}, {pipeline_mode = #tpu.pipeline_mode<synchronous>, transform_indices = @transform_1, window_bounds = array<i64: 32, 32>}, {pipeline_mode = #tpu.pipeline_mode<synchronous>, transform_indices = @transform_2, window_bounds = array<i64: 4, 1024>}, {pipeline_mode = #tpu.pipeline_mode<synchronous>, transform_indices = @transform_3, window_bounds = array<i64: 8, 32, 128>}]} {
    %c0 = arith.constant 0 : index
    %c0_0 = arith.constant 0 : index
    %0 = vector.load %arg1[%c0, %c0_0] : memref<32x4xf32, #tpu.memory_space<vmem>>, vector<32x4xf32>
    %c0_1 = arith.constant 0 : index
    %c0_2 = arith.constant 0 : index
    %1 = vector.load %arg3[%c0_1, %c0_2] : memref<4x1024xf32, #tpu.memory_space<vmem>>, vector<4x1024xf32>
    %cst = arith.constant dense<0.000000e+00> : vector<32x1024xf32>
    %2 = tpu.matmul %0, %1, %cst {dimension_numbers = #tpu.dot_dimension_numbers<[1], [0], [0], [1], [0, 0, 1, 1], [], []>} : vector<32x4xf32>, vector<4x1024xf32>, vector<32x1024xf32> -> vector<32x1024xf32>
    %c0_3 = arith.constant 0 : index
    %c0_4 = arith.constant 0 : index
    %3 = vector.load %arg5[%c0_3, %c0_4] : memref<32x1024xf32, #tpu.memory_space<vmem>>, vector<32x1024xf32>
    tpu.vector_store %arg5[%c0_3, %c0_4], %2 {strides = array<i32>} : memref<32x1024xf32, #tpu.memory_space<vmem>>, vector<32x1024xf32>,
    %cst_5 = arith.constant 0.000000e+00 : f32
    %4 = vector.broadcast %cst_5 : f32 to vector<32x128xf32>
    %c0_i32 = arith.constant 0 : i32
    %c128_i32 = arith.constant 128 : i32
    %5 = arith.muli %c0_i32, %c128_i32 : i32
    %6 = tpu.assume_multiple %5, 128 : i32
    %c0_6 = arith.constant 0 : index
    %7 = arith.index_cast %6 : i32 to index
    %8 = vector.load %arg5[%c0_6, %7] : memref<32x1024xf32, #tpu.memory_space<vmem>>, vector<32x128xf32>
    %c0_7 = arith.constant 0 : index
    %c0_8 = arith.constant 0 : index
    %9 = vector.load %arg2[%c0_7, %c0_8] : memref<32x32xf32, #tpu.memory_space<vmem>>, vector<32x32xf32>
    %cst_9 = arith.constant dense<0.000000e+00> : vector<32x128xf32>
    %10 = tpu.matmul %9, %4, %cst_9 {dimension_numbers = #tpu.dot_dimension_numbers<[1], [0], [0], [1], [0, 0, 1, 1], [], []>} : vector<32x32xf32>, vector<32x128xf32>, vector<32x128xf32> -> vector<32x128xf32>
    %11 = arith.addf %8, %10 : vector<32x128xf32>
    %12 = math.tanh %11 : vector<32x128xf32>
    %13 = arith.index_cast %c0_i32 : i32 to index
    %c0_10 = arith.constant 0 : index
    %c0_11 = arith.constant 0 : index
    %14 = vector.load %arg4[%13, %c0_10, %c0_11] : memref<8x32x128xf32, #tpu.memory_space<vmem>>, vector<1x32x128xf32>
    %15 = vector.shape_cast %14 : vector<1x32x128xf32> to vector<32x128xf32>
    %16 = vector.shape_cast %12 : vector<32x128xf32> to vector<1x32x128xf32>
    tpu.vector_store %arg4[%13, %c0_10, %c0_11], %16 {strides = array<i32>} : memref<8x32x128xf32, #tpu.memory_space<vmem>>, vector<1x32x128xf32>,
    %c1_i32 = arith.constant 1 : i32
    %c128_i32_12 = arith.constant 128 : i32
    %17 = arith.muli %c1_i32, %c128_i32_12 : i32
    %18 = tpu.assume_multiple %17, 128 : i32
    %c0_13 = arith.constant 0 : index
    %19 = arith.index_cast %18 : i32 to index
    %20 = vector.load %arg5[%c0_13, %19] : memref<32x1024xf32, #tpu.memory_space<vmem>>, vector<32x128xf32>
    %c0_14 = arith.constant 0 : index
    %c0_15 = arith.constant 0 : index
    %21 = vector.load %arg2[%c0_14, %c0_15] : memref<32x32xf32, #tpu.memory_space<vmem>>, vector<32x32xf32>
    %cst_16 = arith.constant dense<0.000000e+00> : vector<32x128xf32>
    %22 = tpu.matmul %21, %12, %cst_16 {dimension_numbers = #tpu.dot_dimension_numbers<[1], [0], [0], [1], [0, 0, 1, 1], [], []>} : vector<32x32xf32>, vector<32x128xf32>, vector<32x128xf32> -> vector<32x128xf32>
    %23 = arith.addf %20, %22 : vector<32x128xf32>
    %24 = math.tanh %23 : vector<32x128xf32>
    %25 = arith.index_cast %c1_i32 : i32 to index
    %c0_17 = arith.constant 0 : index
    %c0_18 = arith.constant 0 : index
    %26 = vector.load %arg4[%25, %c0_17, %c0_18] : memref<8x32x128xf32, #tpu.memory_space<vmem>>, vector<1x32x128xf32>
    %27 = vector.shape_cast %26 : vector<1x32x128xf32> to vector<32x128xf32>
    %28 = vector.shape_cast %24 : vector<32x128xf32> to vector<1x32x128xf32>
    tpu.vector_store %arg4[%25, %c0_17, %c0_18], %28 {strides = array<i32>} : memref<8x32x128xf32, #tpu.memory_space<vmem>>, vector<1x32x128xf32>,
    %c2_i32 = arith.constant 2 : i32
    %c128_i32_19 = arith.constant 128 : i32
    %29 = arith.muli %c2_i32, %c128_i32_19 : i32
    %30 = tpu.assume_multiple %29, 128 : i32
    %c0_20 = arith.constant 0 : index
    %31 = arith.index_cast %30 : i32 to index
    %32 = vector.load %arg5[%c0_20, %31] : memref<32x1024xf32, #tpu.memory_space<vmem>>, vector<32x128xf32>
    %c0_21 = arith.constant 0 : index
    %c0_22 = arith.constant 0 : index
    %33 = vector.load %arg2[%c0_21, %c0_22] : memref<32x32xf32, #tpu.memory_space<vmem>>, vector<32x32xf32>
    %cst_23 = arith.constant dense<0.000000e+00> : vector<32x128xf32>
    %34 = tpu.matmul %33, %24, %cst_23 {dimension_numbers = #tpu.dot_dimension_numbers<[1], [0], [0], [1], [0, 0, 1, 1], [], []>} : vector<32x32xf32>, vector<32x128xf32>, vector<32x128xf32> -> vector<32x128xf32>
    %35 = arith.addf %32, %34 : vector<32x128xf32>
    %36 = math.tanh %35 : vector<32x128xf32>
    %37 = arith.index_cast %c2_i32 : i32 to index
    %c0_24 = arith.constant 0 : index
    %c0_25 = arith.constant 0 : index
    %38 = vector.load %arg4[%37, %c0_24, %c0_25] : memref<8x32x128xf32, #tpu.memory_space<vmem>>, vector<1x32x128xf32>
    %39 = vector.shape_cast %38 : vector<1x32x128xf32> to vector<32x128xf32>
    %40 = vector.shape_cast %36 : vector<32x128xf32> to vector<1x32x128xf32>
    tpu.vector_store %arg4[%37, %c0_24, %c0_25], %40 {strides = array<i32>} : memref<8x32x128xf32, #tpu.memory_space<vmem>>, vector<1x32x128xf32>,
    %c3_i32 = arith.constant 3 : i32
    %c128_i32_26 = arith.constant 128 : i32
    %41 = arith.muli %c3_i32, %c128_i32_26 : i32
    %42 = tpu.assume_multiple %41, 128 : i32
    %c0_27 = arith.constant 0 : index
    %43 = arith.index_cast %42 : i32 to index
    %44 = vector.load %arg5[%c0_27, %43] : memref<32x1024xf32, #tpu.memory_space<vmem>>, vector<32x128xf32>
    %c0_28 = arith.constant 0 : index
    %c0_29 = arith.constant 0 : index
    %45 = vector.load %arg2[%c0_28, %c0_29] : memref<32x32xf32, #tpu.memory_space<vmem>>, vector<32x32xf32>
    %cst_30 = arith.constant dense<0.000000e+00> : vector<32x128xf32>
    %46 = tpu.matmul %45, %36, %cst_30 {dimension_numbers = #tpu.dot_dimension_numbers<[1], [0], [0], [1], [0, 0, 1, 1], [], []>} : vector<32x32xf32>, vector<32x128xf32>, vector<32x128xf32> -> vector<32x128xf32>
    %47 = arith.addf %44, %46 : vector<32x128xf32>
    %48 = math.tanh %47 : vector<32x128xf32>
    %49 = arith.index_cast %c3_i32 : i32 to index
    %c0_31 = arith.constant 0 : index
    %c0_32 = arith.constant 0 : index
    %50 = vector.load %arg4[%49, %c0_31, %c0_32] : memref<8x32x128xf32, #tpu.memory_space<vmem>>, vector<1x32x128xf32>
    %51 = vector.shape_cast %50 : vector<1x32x128xf32> to vector<32x128xf32>
    %52 = vector.shape_cast %48 : vector<32x128xf32> to vector<1x32x128xf32>
    tpu.vector_store %arg4[%49, %c0_31, %c0_32], %52 {strides = array<i32>} : memref<8x32x128xf32, #tpu.memory_space<vmem>>, vector<1x32x128xf32>,
    %c4_i32 = arith.constant 4 : i32
    %c128_i32_33 = arith.constant 128 : i32
    %53 = arith.muli %c4_i32, %c128_i32_33 : i32
    %54 = tpu.assume_multiple %53, 128 : i32
    %c0_34 = arith.constant 0 : index
    %55 = arith.index_cast %54 : i32 to index
    %56 = vector.load %arg5[%c0_34, %55] : memref<32x1024xf32, #tpu.memory_space<vmem>>, vector<32x128xf32>
    %c0_35 = arith.constant 0 : index
    %c0_36 = arith.constant 0 : index
    %57 = vector.load %arg2[%c0_35, %c0_36] : memref<32x32xf32, #tpu.memory_space<vmem>>, vector<32x32xf32>
    %cst_37 = arith.constant dense<0.000000e+00> : vector<32x128xf32>
    %58 = tpu.matmul %57, %48, %cst_37 {dimension_numbers = #tpu.dot_dimension_numbers<[1], [0], [0], [1], [0, 0, 1, 1], [], []>} : vector<32x32xf32>, vector<32x128xf32>, vector<32x128xf32> -> vector<32x128xf32>
    %59 = arith.addf %56, %58 : vector<32x128xf32>
    %60 = math.tanh %59 : vector<32x128xf32>
    %61 = arith.index_cast %c4_i32 : i32 to index
    %c0_38 = arith.constant 0 : index
    %c0_39 = arith.constant 0 : index
    %62 = vector.load %arg4[%61, %c0_38, %c0_39] : memref<8x32x128xf32, #tpu.memory_space<vmem>>, vector<1x32x128xf32>
    %63 = vector.shape_cast %62 : vector<1x32x128xf32> to vector<32x128xf32>
    %64 = vector.shape_cast %60 : vector<32x128xf32> to vector<1x32x128xf32>
    tpu.vector_store %arg4[%61, %c0_38, %c0_39], %64 {strides = array<i32>} : memref<8x32x128xf32, #tpu.memory_space<vmem>>, vector<1x32x128xf32>,
    %c5_i32 = arith.constant 5 : i32
    %c128_i32_40 = arith.constant 128 : i32
    %65 = arith.muli %c5_i32, %c128_i32_40 : i32
    %66 = tpu.assume_multiple %65, 128 : i32
    %c0_41 = arith.constant 0 : index
    %67 = arith.index_cast %66 : i32 to index
    %68 = vector.load %arg5[%c0_41, %67] : memref<32x1024xf32, #tpu.memory_space<vmem>>, vector<32x128xf32>
    %c0_42 = arith.constant 0 : index
    %c0_43 = arith.constant 0 : index
    %69 = vector.load %arg2[%c0_42, %c0_43] : memref<32x32xf32, #tpu.memory_space<vmem>>, vector<32x32xf32>
    %cst_44 = arith.constant dense<0.000000e+00> : vector<32x128xf32>
    %70 = tpu.matmul %69, %60, %cst_44 {dimension_numbers = #tpu.dot_dimension_numbers<[1], [0], [0], [1], [0, 0, 1, 1], [], []>} : vector<32x32xf32>, vector<32x128xf32>, vector<32x128xf32> -> vector<32x128xf32>
    %71 = arith.addf %68, %70 : vector<32x128xf32>
    %72 = math.tanh %71 : vector<32x128xf32>
    %73 = arith.index_cast %c5_i32 : i32 to index
    %c0_45 = arith.constant 0 : index
    %c0_46 = arith.constant 0 : index
    %74 = vector.load %arg4[%73, %c0_45, %c0_46] : memref<8x32x128xf32, #tpu.memory_space<vmem>>, vector<1x32x128xf32>
    %75 = vector.shape_cast %74 : vector<1x32x128xf32> to vector<32x128xf32>
    %76 = vector.shape_cast %72 : vector<32x128xf32> to vector<1x32x128xf32>
    tpu.vector_store %arg4[%73, %c0_45, %c0_46], %76 {strides = array<i32>} : memref<8x32x128xf32, #tpu.memory_space<vmem>>, vector<1x32x128xf32>,
    %c6_i32 = arith.constant 6 : i32
    %c128_i32_47 = arith.constant 128 : i32
    %77 = arith.muli %c6_i32, %c128_i32_47 : i32
    %78 = tpu.assume_multiple %77, 128 : i32
    %c0_48 = arith.constant 0 : index
    %79 = arith.index_cast %78 : i32 to index
    %80 = vector.load %arg5[%c0_48, %79] : memref<32x1024xf32, #tpu.memory_space<vmem>>, vector<32x128xf32>
    %c0_49 = arith.constant 0 : index
    %c0_50 = arith.constant 0 : index
    %81 = vector.load %arg2[%c0_49, %c0_50] : memref<32x32xf32, #tpu.memory_space<vmem>>, vector<32x32xf32>
    %cst_51 = arith.constant dense<0.000000e+00> : vector<32x128xf32>
    %82 = tpu.matmul %81, %72, %cst_51 {dimension_numbers = #tpu.dot_dimension_numbers<[1], [0], [0], [1], [0, 0, 1, 1], [], []>} : vector<32x32xf32>, vector<32x128xf32>, vector<32x128xf32> -> vector<32x128xf32>
    %83 = arith.addf %80, %82 : vector<32x128xf32>
    %84 = math.tanh %83 : vector<32x128xf32>
    %85 = arith.index_cast %c6_i32 : i32 to index
    %c0_52 = arith.constant 0 : index
    %c0_53 = arith.constant 0 : index
    %86 = vector.load %arg4[%85, %c0_52, %c0_53] : memref<8x32x128xf32, #tpu.memory_space<vmem>>, vector<1x32x128xf32>
    %87 = vector.shape_cast %86 : vector<1x32x128xf32> to vector<32x128xf32>
    %88 = vector.shape_cast %84 : vector<32x128xf32> to vector<1x32x128xf32>
    tpu.vector_store %arg4[%85, %c0_52, %c0_53], %88 {strides = array<i32>} : memref<8x32x128xf32, #tpu.memory_space<vmem>>, vector<1x32x128xf32>,
    %c7_i32 = arith.constant 7 : i32
    %c128_i32_54 = arith.constant 128 : i32
    %89 = arith.muli %c7_i32, %c128_i32_54 : i32
    %90 = tpu.assume_multiple %89, 128 : i32
    %c0_55 = arith.constant 0 : index
    %91 = arith.index_cast %90 : i32 to index
    %92 = vector.load %arg5[%c0_55, %91] : memref<32x1024xf32, #tpu.memory_space<vmem>>, vector<32x128xf32>
    %c0_56 = arith.constant 0 : index
    %c0_57 = arith.constant 0 : index
    %93 = vector.load %arg2[%c0_56, %c0_57] : memref<32x32xf32, #tpu.memory_space<vmem>>, vector<32x32xf32>
    %cst_58 = arith.constant dense<0.000000e+00> : vector<32x128xf32>
    %94 = tpu.matmul %93, %84, %cst_58 {dimension_numbers = #tpu.dot_dimension_numbers<[1], [0], [0], [1], [0, 0, 1, 1], [], []>} : vector<32x32xf32>, vector<32x128xf32>, vector<32x128xf32> -> vector<32x128xf32>
    %95 = arith.addf %92, %94 : vector<32x128xf32>
    %96 = math.tanh %95 : vector<32x128xf32>
    %97 = arith.index_cast %c7_i32 : i32 to index
    %c0_59 = arith.constant 0 : index
    %c0_60 = arith.constant 0 : index
    %98 = vector.load %arg4[%97, %c0_59, %c0_60] : memref<8x32x128xf32, #tpu.memory_space<vmem>>, vector<1x32x128xf32>
    %99 = vector.shape_cast %98 : vector<1x32x128xf32> to vector<32x128xf32>
    %100 = vector.shape_cast %96 : vector<32x128xf32> to vector<1x32x128xf32>
    tpu.vector_store %arg4[%97, %c0_59, %c0_60], %100 {strides = array<i32>} : memref<8x32x128xf32, #tpu.memory_space<vmem>>, vector<1x32x128xf32>,
    %c8_i32 = arith.constant 8 : i32
    return
  }
  func.func @transform_0(%arg0: i32) -> (i32, i32) {
    %c0_i32 = arith.constant 0 : i32
    %c0_i32_0 = arith.constant 0 : i32
    %c0_i32_1 = arith.constant 0 : i32
    return %c0_i32, %c0_i32_0 : i32, i32
  }
  func.func @transform_1(%arg0: i32) -> (i32, i32) {
    %c0_i32 = arith.constant 0 : i32
    %c0_i32_0 = arith.constant 0 : i32
    %c0_i32_1 = arith.constant 0 : i32
    return %c0_i32, %c0_i32_0 : i32, i32
  }
  func.func @transform_2(%arg0: i32) -> (i32, i32) {
    %c0_i32 = arith.constant 0 : i32
    %c0_i32_0 = arith.constant 0 : i32
    %c0_i32_1 = arith.constant 0 : i32
    return %c0_i32, %c0_i32_0 : i32, i32
  }
  func.func @transform_3(%arg0: i32) -> (i32, i32, i32) {
    %c0_i32 = arith.constant 0 : i32
    %c0_i32_0 = arith.constant 0 : i32
    %c0_i32_1 = arith.constant 0 : i32
    %c0_i32_2 = arith.constant 0 : i32
    return %c0_i32, %c0_i32_0, %c0_i32_1 : i32, i32, i32
  }
}

</mosaic_0001>

<llo_original>
// kernel: tpu_custom_call.1
$region0: #{tpu_custom_call.1}
  #allocation0 [shape = 'u32[]', space=smem, size = 0x4, offset = 0x4, fixed_abs, tag = 'smem constant byte address 0x4 - core index']
  #allocation1 [shape = 'u32[144,128]{1,0:T(1,128)}', space=vmem, size = 0x12000, scoped, tag = 'internal scratch']
  #allocation2 [shape = 'f32[32,1024]{1,0:T(8,128)}', space=vmem, size = 0x20000, scoped, tag = 'scratch operand']
  %s0 = inlined_call_operand.vmem [shape: f32[32,4], index: 0, kind: input, shape index: {}]
  %s1 = inlined_call_operand.vmem [shape: f32[32,32], index: 1, kind: input, shape index: {}]
  %s2 = inlined_call_operand.hbm [shape: f32[4,1024], index: 2, kind: input, shape index: {}]
  %s3 = inlined_call_operand.hbm [shape: f32[8,32,128], index: 3, kind: output, shape index: {}]
  %s4 = sld [smem:[#allocation0]]
  $region26: #{tpu_custom_call.1} parent=0
    _
  %s6 = ssub.s32 1, %s4
  %s7 = scalar_select 0, %s6, %s4
  $region1: #{tpu_custom_call.1} parent=0
    #allocation3 [shape = 'u8[16384]{0}', space=vmem, size = 0x4000, scoped, tag = 'input window, operand 2, single buffered']
    #allocation4 [shape = 's32[1]{0}', space=sflag, size = 0x4, scoped, tag = 'scoped memory for tpu_custom_call.1']
    #allocation5 [shape = 's32[1]{0}', space=sflag, size = 0x4, scoped, tag = 'scoped memory for tpu_custom_call.1']
    #allocation6 [shape = 'u8[131072]{0}', space=vmem, size = 0x20000, scoped, tag = 'output window, operand 0, single buffered']
    %8 = vsyncpa [#allocation4], 0
    %9 = vsyncpa [#allocation5], 0
    // Predicated region
    $region2: #{tpu_custom_call.1} parent=1 // pred_check
      _
    $region3: #{tpu_custom_call.1} parent=1 // pred_check_branch
      %11 = sbr.rel (0) target = $region5
    $region4: #{tpu_custom_call.1} parent=1 // pred_region
      _
    $region5: #{tpu_custom_call.1} parent=1 // pred_fallthru
      _
    // Predicated region
    $region6: #{tpu_custom_call.1} parent=1 // pred_check
      _
    $region7: #{tpu_custom_call.1} parent=1 // pred_check_branch
      %13 = sbr.rel (0) target = $region9
    $region8: #{tpu_custom_call.1} parent=1 // pred_region
      _
    $region9: #{tpu_custom_call.1} parent=1 // pred_fallthru
      _
    // Predicated region
    $region10: #{tpu_custom_call.1} parent=1 // pred_check
      _
    $region11: #{tpu_custom_call.1} parent=1 // pred_check_branch
      %15 = sbr.rel (0) target = $region13
    $region12: #{tpu_custom_call.1} parent=1 // pred_region
      %s17 = ssub.s32 512, 512
      %18 = vsyncadd [#allocation4], %s17
      %s20 = sshll.u32 [#allocation3], 4
      %s21 = int_to_ptr.vmem [resolvable:$true] %s20
      %23 = dma.hbm_to_vmem [thread:$0]  %s2, 512, %s21, [#allocation4]
    $region13: #{tpu_custom_call.1} parent=1 // pred_fallthru
      _
    // Predicated region
    $region14: #{tpu_custom_call.1} parent=1 // pred_check
      _
    $region15: #{tpu_custom_call.1} parent=1 // pred_check_branch
      %25 = sbr.rel (0) target = $region17
    $region16: #{tpu_custom_call.1} parent=1 // pred_region
      %26 = dma.done [#allocation4], 512
    $region17: #{tpu_custom_call.1} parent=1 // pred_fallthru
      _
    %v27 = vld [vmem:[%s0] sm:$0xff]
    %v28 = vld [vmem:[%s0 + $0x8] sm:$0xff]
    %v29 = vld [vmem:[%s0 + $0x10] sm:$0xff]
    %v30 = vld [vmem:[%s0 + $0x18] sm:$0xff]
    %v31 = vld [vmem:[#allocation3] sm:$0xff]
    %v32 = vld [vmem:[#allocation3 + $0x8] sm:$0xff]
    %v33 = vld [vmem:[#allocation3 + $0x10] sm:$0xff]
    %v34 = vld [vmem:[#allocation3 + $0x18] sm:$0xff]
    %v39 = vcombine.high %v31, %v31
    %v40 = vcombine.high %v32, %v32
    %v41 = vcombine.high %v33, %v33
    %v42 = vcombine.high %v34, %v34
    %vm43 = vcmask 31744
    %v45 = vsel %vm43, %v27, 0
    %v48 = vsel %vm43, %v28, 0
    %v51 = vsel %vm43, %v29, 0
    %v54 = vsel %vm43, %v30, 0
    %vm56 = vcmask 1043456
    %v57 = vsel %vm56, %v31, 0
    %v59 = vsel %vm56, %v39, 0
    %v61 = vsel %vm56, %v32, 0
    %v63 = vsel %vm56, %v40, 0
    %v65 = vsel %vm56, %v33, 0
    %v67 = vsel %vm56, %v41, 0
    %v69 = vsel %vm56, %v34, 0
    %v71 = vsel %vm56, %v42, 0
    %73 = vmatprep.subr.mxu0 0.0
    %74 = vmatpush1.msra.mxu0 0.0
    %75 = vmatprep.subr.mxu0 0.0
    %76 = vmatpush1.msra.mxu0 0.0
    %77 = vmatprep.subr.mxu0 0.0
    %78 = vmatpush1.msra.mxu0 0.0
    %79 = vmatprep.subr.mxu0 0.0
    %80 = vmatpush1.msra.mxu0 0.0
    %81 = vmatprep.subr.mxu0 0.0
    %82 = vmatpush1.msra.mxu0 0.0
    %83 = vmatprep.subr.mxu0 0.0
    %84 = vmatpush1.msra.mxu0 0.0
    %85 = vmatprep.subr.mxu0 0.0
    %86 = vmatpush1.msra.mxu0 0.0
    %87 = vmatprep.subr.mxu0 0.0
    %88 = vmatpush1.msra.mxu0 0.0
    %89 = vmatprep.subr.mxu0 0.0
    %90 = vmatpush1.msra.mxu0 0.0
    %91 = vmatprep.subr.mxu0 0.0
    %92 = vmatpush1.msra.mxu0 0.0
    %93 = vmatprep.subr.mxu0 0.0
    %94 = vmatpush1.msra.mxu0 0.0
    %95 = vmatprep.subr.mxu0 0.0
    %96 = vmatpush1.msra.mxu0 0.0
    %97 = vmatprep.subr.mxu0 0.0
    %98 = vmatpush1.msra.mxu0 0.0
    %99 = vmatprep.subr.mxu0 0.0
    %100 = vmatpush1.msra.mxu0 0.0
    %101 = vmatprep.subr.mxu0 0.0
    %102 = vmatpush1.msra.mxu0 0.0
    %103 = vmatprep.subr.mxu0 %v59
    %104 = vmatpush1.msra.mxu0 %v57
    %105 = vmatprep.subr.mxu0 0.0
    %106 = vmatpush2.msra.mxu0 0.0
    %107 = vmatprep.subr.mxu0 0.0
    %108 = vmatpush2.msra.mxu0 0.0
    %109 = vmatprep.subr.mxu0 0.0
    %110 = vmatpush2.msra.mxu0 0.0
    %111 = vmatprep.subr.mxu0 0.0
    %112 = vmatpush2.msra.mxu0 0.0
    %113 = vmatprep.subr.mxu0 0.0
    %114 = vmatpush2.msra.mxu0 0.0
    %115 = vmatprep.subr.mxu0 0.0
    %116 = vmatpush2.msra.mxu0 0.0
    %117 = vmatprep.subr.mxu0 0.0
    %118 = vmatpush2.msra.mxu0 0.0
    %119 = vmatprep.subr.mxu0 0.0
    %120 = vmatpush2.msra.mxu0 0.0
    %121 = vmatprep.subr.mxu0 0.0
    %122 = vmatpush2.msra.mxu0 0.0
    %123 = vmatprep.subr.mxu0 0.0
    %124 = vmatpush2.msra.mxu0 0.0
    %125 = vmatprep.subr.mxu0 0.0
    %126 = vmatpush2.msra.mxu0 0.0
    %127 = vmatprep.subr.mxu0 0.0
    %128 = vmatpush2.msra.mxu0 0.0
    %129 = vmatprep.subr.mxu0 0.0
    %130 = vmatpush2.msra.mxu0 0.0
    %131 = vmatprep.subr.mxu0 0.0
    %132 = vmatpush2.msra.mxu0 0.0
    %133 = vmatprep.subr.mxu0 0.0
    %134 = vmatpush2.msra.mxu0 0.0
    %135 = vmatprep.subr.mxu0 0.0
    %136 = vmatpush2.msra.mxu0 0.0
    %137 = vmatprep.mubr.f32.mxu0 0.0
    %138 = vmatmul.mubr.f32.gmra.mxu0 %v45
    %v139 = vpop.f32.mrf.mxu0
    %v140 = vadd.f32 0.0, %v139
    %v141 = vpop.f32.mrf.mxu0
    %v142 = vadd.f32 0.0, %v141
    %143 = vmatprep.mubr.f32.mxu0 0.0
    %144 = vmatmul.mubr.f32.gmra.mxu0 %v48
    %v145 = vpop.f32.mrf.mxu0
    %v146 = vadd.f32 0.0, %v145
    %v147 = vpop.f32.mrf.mxu0
    %v148 = vadd.f32 0.0, %v147
    %149 = vmatprep.mubr.f32.mxu0 0.0
    %150 = vmatmul.mubr.f32.gmra.mxu0 %v51
    %v151 = vpop.f32.mrf.mxu0
    %v152 = vadd.f32 0.0, %v151
    %v153 = vpop.f32.mrf.mxu0
    %v154 = vadd.f32 0.0, %v153
    %155 = vmatprep.mubr.f32.mxu0 0.0
    %156 = vmatmul.mubr.f32.gmra.mxu0 %v54
    %v157 = vpop.f32.mrf.mxu0
    %v158 = vadd.f32 0.0, %v157
    %v159 = vpop.f32.mrf.mxu0
    %v160 = vadd.f32 0.0, %v159
    %161 = vdwg.mxu0
    %162 = vmatprep.subr.mxu0 0.0
    %163 = vmatpush1.msra.mxu0 0.0
    %164 = vmatprep.subr.mxu0 0.0
    %165 = vmatpush1.msra.mxu0 0.0
    %166 = vmatprep.subr.mxu0 0.0
    %167 = vmatpush1.msra.mxu0 0.0
    %168 = vmatprep.subr.mxu0 0.0
    %169 = vmatpush1.msra.mxu0 0.0
    %170 = vmatprep.subr.mxu0 0.0
    %171 = vmatpush1.msra.mxu0 0.0
    %172 = vmatprep.subr.mxu0 0.0
    %173 = vmatpush1.msra.mxu0 0.0
    %174 = vmatprep.subr.mxu0 0.0
    %175 = vmatpush1.msra.mxu0 0.0
    %176 = vmatprep.subr.mxu0 0.0
    %177 = vmatpush1.msra.mxu0 0.0
    %178 = vmatprep.subr.mxu0 0.0
    %179 = vmatpush1.msra.mxu0 0.0
    %180 = vmatprep.subr.mxu0 0.0
    %181 = vmatpush1.msra.mxu0 0.0
    %182 = vmatprep.subr.mxu0 0.0
    %183 = vmatpush1.msra.mxu0 0.0
    %184 = vmatprep.subr.mxu0 0.0
    %185 = vmatpush1.msra.mxu0 0.0
    %186 = vmatprep.subr.mxu0 0.0
    %187 = vmatpush1.msra.mxu0 0.0
    %188 = vmatprep.subr.mxu0 0.0
    %189 = vmatpush1.msra.mxu0 0.0
    %190 = vmatprep.subr.mxu0 0.0
    %191 = vmatpush1.msra.mxu0 0.0
    %192 = vmatprep.subr.mxu0 %v63
    %193 = vmatpush1.msra.mxu0 %v61
    %194 = vmatprep.subr.mxu0 0.0
    %195 = vmatpush2.msra.mxu0 0.0
    %196 = vmatprep.subr.mxu0 0.0
    %197 = vmatpush2.msra.mxu0 0.0
    %198 = vmatprep.subr.mxu0 0.0
    %199 = vmatpush2.msra.mxu0 0.0
    %200 = vmatprep.subr.mxu0 0.0
    %201 = vmatpush2.msra.mxu0 0.0
    %202 = vmatprep.subr.mxu0 0.0
    %203 = vmatpush2.msra.mxu0 0.0
    %204 = vmatprep.subr.mxu0 0.0
    %205 = vmatpush2.msra.mxu0 0.0
    %206 = vmatprep.subr.mxu0 0.0
    %207 = vmatpush2.msra.mxu0 0.0
    %208 = vmatprep.subr.mxu0 0.0
    %209 = vmatpush2.msra.mxu0 0.0
    %210 = vmatprep.subr.mxu0 0.0
    %211 = vmatpush2.msra.mxu0 0.0
    %212 = vmatprep.subr.mxu0 0.0
    %213 = vmatpush2.msra.mxu0 0.0
    %214 = vmatprep.subr.mxu0 0.0
    %215 = vmatpush2.msra.mxu0 0.0
    %216 = vmatprep.subr.mxu0 0.0
    %217 = vmatpush2.msra.mxu0 0.0
    %218 = vmatprep.subr.mxu0 0.0
    %219 = vmatpush2.msra.mxu0 0.0
    %220 = vmatprep.subr.mxu0 0.0
    %221 = vmatpush2.msra.mxu0 0.0
    %222 = vmatprep.subr.mxu0 0.0
    %223 = vmatpush2.msra.mxu0 0.0
    %224 = vmatprep.subr.mxu0 0.0
    %225 = vmatpush2.msra.mxu0 0.0
    %226 = vmatprep.mubr.f32.mxu0 0.0
    %227 = vmatmul.mubr.f32.gmra.mxu0 %v45
    %v228 = vpop.f32.mrf.mxu0
    %v229 = vadd.f32 0.0, %v228
    %v230 = vpop.f32.mrf.mxu0
    %v231 = vadd.f32 0.0, %v230
    %232 = vmatprep.mubr.f32.mxu0 0.0
    %233 = vmatmul.mubr.f32.gmra.mxu0 %v48
    %v234 = vpop.f32.mrf.mxu0
    %v235 = vadd.f32 0.0, %v234
    %v236 = vpop.f32.mrf.mxu0
    %v237 = vadd.f32 0.0, %v236
    %238 = vmatprep.mubr.f32.mxu0 0.0
    %239 = vmatmul.mubr.f32.gmra.mxu0 %v51
    %v240 = vpop.f32.mrf.mxu0
    %v241 = vadd.f32 0.0, %v240
    %v242 = vpop.f32.mrf.mxu0
    %v243 = vadd.f32 0.0, %v242
    %244 = vmatprep.mubr.f32.mxu0 0.0
    %245 = vmatmul.mubr.f32.gmra.mxu0 %v54
    %v246 = vpop.f32.mrf.mxu0
    %v247 = vadd.f32 0.0, %v246
    %v248 = vpop.f32.mrf.mxu0
    %v249 = vadd.f32 0.0, %v248
    %250 = vdwg.mxu0
    %251 = vmatprep.subr.mxu0 0.0
    %252 = vmatpush1.msra.mxu0 0.0
    %253 = vmatprep.subr.mxu0 0.0
    %254 = vmatpush1.msra.mxu0 0.0
    %255 = vmatprep.subr.mxu0 0.0
    %256 = vmatpush1.msra.mxu0 0.0
    %257 = vmatprep.subr.mxu0 0.0
    %258 = vmatpush1.msra.mxu0 0.0
    %259 = vmatprep.subr.mxu0 0.0
    %260 = vmatpush1.msra.mxu0 0.0
    %261 = vmatprep.subr.mxu0 0.0
    %262 = vmatpush1.msra.mxu0 0.0
    %263 = vmatprep.subr.mxu0 0.0
    %264 = vmatpush1.msra.mxu0 0.0
    %265 = vmatprep.subr.mxu0 0.0
    %266 = vmatpush1.msra.mxu0 0.0
    %267 = vmatprep.subr.mxu0 0.0
    %268 = vmatpush1.msra.mxu0 0.0
    %269 = vmatprep.subr.mxu0 0.0
    %270 = vmatpush1.msra.mxu0 0.0
    %271 = vmatprep.subr.mxu0 0.0
    %272 = vmatpush1.msra.mxu0 0.0
    %273 = vmatprep.subr.mxu0 0.0
    %274 = vmatpush1.msra.mxu0 0.0
    %275 = vmatprep.subr.mxu0 0.0
    %276 = vmatpush1.msra.mxu0 0.0
    %277 = vmatprep.subr.mxu0 0.0
    %278 = vmatpush1.msra.mxu0 0.0
    %279 = vmatprep.subr.mxu0 0.0
    %280 = vmatpush1.msra.mxu0 0.0
    %281 = vmatprep.subr.mxu0 %v67
    %282 = vmatpush1.msra.mxu0 %v65
    %283 = vmatprep.subr.mxu0 0.0
    %284 = vmatpush2.msra.mxu0 0.0
    %285 = vmatprep.subr.mxu0 0.0
    %286 = vmatpush2.msra.mxu0 0.0
    %287 = vmatprep.subr.mxu0 0.0
    %288 = vmatpush2.msra.mxu0 0.0
    %289 = vmatprep.subr.mxu0 0.0
    %290 = vmatpush2.msra.mxu0 0.0
    %291 = vmatprep.subr.mxu0 0.0
    %292 = vmatpush2.msra.mxu0 0.0
    %293 = vmatprep.subr.mxu0 0.0
    %294 = vmatpush2.msra.mxu0 0.0
    %295 = vmatprep.subr.mxu0 0.0
    %296 = vmatpush2.msra.mxu0 0.0
    %297 = vmatprep.subr.mxu0 0.0
    %298 = vmatpush2.msra.mxu0 0.0
    %299 = vmatprep.subr.mxu0 0.0
    %300 = vmatpush2.msra.mxu0 0.0
    %301 = vmatprep.subr.mxu0 0.0
    %302 = vmatpush2.msra.mxu0 0.0
    %303 = vmatprep.subr.mxu0 0.0
    %304 = vmatpush2.msra.mxu0 0.0
    %305 = vmatprep.subr.mxu0 0.0
    %306 = vmatpush2.msra.mxu0 0.0
    %307 = vmatprep.subr.mxu0 0.0
    %308 = vmatpush2.msra.mxu0 0.0
    %309 = vmatprep.subr.mxu0 0.0
    %310 = vmatpush2.msra.mxu0 0.0
    %311 = vmatprep.subr.mxu0 0.0
    %312 = vmatpush2.msra.mxu0 0.0
    %313 = vmatprep.subr.mxu0 0.0
    %314 = vmatpush2.msra.mxu0 0.0
    %315 = vmatprep.mubr.f32.mxu0 0.0
    %316 = vmatmul.mubr.f32.gmra.mxu0 %v45
    %v317 = vpop.f32.mrf.mxu0
    %v318 = vadd.f32 0.0, %v317
    %v319 = vpop.f32.mrf.mxu0
    %v320 = vadd.f32 0.0, %v319
    %321 = vmatprep.mubr.f32.mxu0 0.0
    %322 = vmatmul.mubr.f32.gmra.mxu0 %v48
    %v323 = vpop.f32.mrf.mxu0
    %v324 = vadd.f32 0.0, %v323
    %v325 = vpop.f32.mrf.mxu0
    %v326 = vadd.f32 0.0, %v325
    %327 = vmatprep.mubr.f32.mxu0 0.0
    %328 = vmatmul.mubr.f32.gmra.mxu0 %v51
    %v329 = vpop.f32.mrf.mxu0
    %v330 = vadd.f32 0.0, %v329
    %v331 = vpop.f32.mrf.mxu0
    %v332 = vadd.f32 0.0, %v331
    %333 = vmatprep.mubr.f32.mxu0 0.0
    %334 = vmatmul.mubr.f32.gmra.mxu0 %v54
    %v335 = vpop.f32.mrf.mxu0
    %v336 = vadd.f32 0.0, %v335
    %v337 = vpop.f32.mrf.mxu0
    %v338 = vadd.f32 0.0, %v337
    %339 = vdwg.mxu0
    %340 = vmatprep.subr.mxu0 0.0
    %341 = vmatpush1.msra.mxu0 0.0
    %342 = vmatprep.subr.mxu0 0.0
    %343 = vmatpush1.msra.mxu0 0.0
    %344 = vmatprep.subr.mxu0 0.0
    %345 = vmatpush1.msra.mxu0 0.0
    %346 = vmatprep.subr.mxu0 0.0
    %347 = vmatpush1.msra.mxu0 0.0
    %348 = vmatprep.subr.mxu0 0.0
    %349 = vmatpush1.msra.mxu0 0.0
    %350 = vmatprep.subr.mxu0 0.0
    %351 = vmatpush1.msra.mxu0 0.0
    %352 = vmatprep.subr.mxu0 0.0
    %353 = vmatpush1.msra.mxu0 0.0
    %354 = vmatprep.subr.mxu0 0.0
    %355 = vmatpush1.msra.mxu0 0.0
    %356 = vmatprep.subr.mxu0 0.0
    %357 = vmatpush1.msra.mxu0 0.0
    %358 = vmatprep.subr.mxu0 0.0
    %359 = vmatpush1.msra.mxu0 0.0
    %360 = vmatprep.subr.mxu0 0.0
    %361 = vmatpush1.msra.mxu0 0.0
    %362 = vmatprep.subr.mxu0 0.0
    %363 = vmatpush1.msra.mxu0 0.0
    %364 = vmatprep.subr.mxu0 0.0
    %365 = vmatpush1.msra.mxu0 0.0
    %366 = vmatprep.subr.mxu0 0.0
    %367 = vmatpush1.msra.mxu0 0.0
    %368 = vmatprep.subr.mxu0 0.0
    %369 = vmatpush1.msra.mxu0 0.0
    %370 = vmatprep.subr.mxu0 %v71
    %371 = vmatpush1.msra.mxu0 %v69
    %372 = vmatprep.subr.mxu0 0.0
    %373 = vmatpush2.msra.mxu0 0.0
    %374 = vmatprep.subr.mxu0 0.0
    %375 = vmatpush2.msra.mxu0 0.0
    %376 = vmatprep.subr.mxu0 0.0
    %377 = vmatpush2.msra.mxu0 0.0
    %378 = vmatprep.subr.mxu0 0.0
    %379 = vmatpush2.msra.mxu0 0.0
    %380 = vmatprep.subr.mxu0 0.0
    %381 = vmatpush2.msra.mxu0 0.0
    %382 = vmatprep.subr.mxu0 0.0
    %383 = vmatpush2.msra.mxu0 0.0
    %384 = vmatprep.subr.mxu0 0.0
    %385 = vmatpush2.msra.mxu0 0.0
    %386 = vmatprep.subr.mxu0 0.0
    %387 = vmatpush2.msra.mxu0 0.0
    %388 = vmatprep.subr.mxu0 0.0
    %389 = vmatpush2.msra.mxu0 0.0
    %390 = vmatprep.subr.mxu0 0.0
    %391 = vmatpush2.msra.mxu0 0.0
    %392 = vmatprep.subr.mxu0 0.0
    %393 = vmatpush2.msra.mxu0 0.0
    %394 = vmatprep.subr.mxu0 0.0
    %395 = vmatpush2.msra.mxu0 0.0
    %396 = vmatprep.subr.mxu0 0.0
    %397 = vmatpush2.msra.mxu0 0.0
    %398 = vmatprep.subr.mxu0 0.0
    %399 = vmatpush2.msra.mxu0 0.0
    %400 = vmatprep.subr.mxu0 0.0
    %401 = vmatpush2.msra.mxu0 0.0
    %402 = vmatprep.subr.mxu0 0.0
    %403 = vmatpush2.msra.mxu0 0.0
    %404 = vmatprep.mubr.f32.mxu0 0.0
    %405 = vmatmul.mubr.f32.gmra.mxu0 %v45
    %v406 = vpop.f32.mrf.mxu0
    %v407 = vadd.f32 0.0, %v406
    %v408 = vpop.f32.mrf.mxu0
    %v409 = vadd.f32 0.0, %v408
    %410 = vmatprep.mubr.f32.mxu0 0.0
    %411 = vmatmul.mubr.f32.gmra.mxu0 %v48
    %v412 = vpop.f32.mrf.mxu0
    %v413 = vadd.f32 0.0, %v412
    %v414 = vpop.f32.mrf.mxu0
    %v415 = vadd.f32 0.0, %v414
    %416 = vmatprep.mubr.f32.mxu0 0.0
    %417 = vmatmul.mubr.f32.gmra.mxu0 %v51
    %v418 = vpop.f32.mrf.mxu0
    %v419 = vadd.f32 0.0, %v418
    %v420 = vpop.f32.mrf.mxu0
    %v421 = vadd.f32 0.0, %v420
    %422 = vmatprep.mubr.f32.mxu0 0.0
    %423 = vmatmul.mubr.f32.gmra.mxu0 %v54
    %v424 = vpop.f32.mrf.mxu0
    %v425 = vadd.f32 0.0, %v424
    %v426 = vpop.f32.mrf.mxu0
    %v427 = vadd.f32 0.0, %v426
    %428 = vdwg.mxu0
    %429 = vst [vmem:[#allocation2] sm:$0xff] %v140
    %430 = vst [vmem:[#allocation2 + $0x8] sm:$0xff] %v142
    %431 = vst [vmem:[#allocation2 + $0x10] sm:$0xff] %v229
    %432 = vst [vmem:[#allocation2 + $0x18] sm:$0xff] %v231
    %433 = vst [vmem:[#allocation2 + $0x20] sm:$0xff] %v318
    %434 = vst [vmem:[#allocation2 + $0x28] sm:$0xff] %v320
    %435 = vst [vmem:[#allocation2 + $0x30] sm:$0xff] %v407
    %436 = vst [vmem:[#allocation2 + $0x38] sm:$0xff] %v409
    %437 = vst [vmem:[#allocation2 + $0x40] sm:$0xff] %v146
    %438 = vst [vmem:[#allocation2 + $0x48] sm:$0xff] %v148
    %439 = vst [vmem:[#allocation2 + $0x50] sm:$0xff] %v235
    %440 = vst [vmem:[#allocation2 + $0x58] sm:$0xff] %v237
    %441 = vst [vmem:[#allocation2 + $0x60] sm:$0xff] %v324
    %442 = vst [vmem:[#allocation2 + $0x68] sm:$0xff] %v326
    %443 = vst [vmem:[#allocation2 + $0x70] sm:$0xff] %v413
    %444 = vst [vmem:[#allocation2 + $0x78] sm:$0xff] %v415
    %445 = vst [vmem:[#allocation2 + $0x80] sm:$0xff] %v152
    %446 = vst [vmem:[#allocation2 + $0x88] sm:$0xff] %v154
    %447 = vst [vmem:[#allocation2 + $0x90] sm:$0xff] %v241
    %448 = vst [vmem:[#allocation2 + $0x98] sm:$0xff] %v243
    %449 = vst [vmem:[#allocation2 + $0xa0] sm:$0xff] %v330
    %450 = vst [vmem:[#allocation2 + $0xa8] sm:$0xff] %v332
    %451 = vst [vmem:[#allocation2 + $0xb0] sm:$0xff] %v419
    %452 = vst [vmem:[#allocation2 + $0xb8] sm:$0xff] %v421
    %453 = vst [vmem:[#allocation2 + $0xc0] sm:$0xff] %v158
    %454 = vst [vmem:[#allocation2 + $0xc8] sm:$0xff] %v160
    %455 = vst [vmem:[#allocation2 + $0xd0] sm:$0xff] %v247
    %456 = vst [vmem:[#allocation2 + $0xd8] sm:$0xff] %v249
    %457 = vst [vmem:[#allocation2 + $0xe0] sm:$0xff] %v336
    %458 = vst [vmem:[#allocation2 + $0xe8] sm:$0xff] %v338
    %459 = vst [vmem:[#allocation2 + $0xf0] sm:$0xff] %v425
    %460 = vst [vmem:[#allocation2 + $0xf8] sm:$0xff] %v427
    %v461 = vld [vmem:[#allocation2] sm:$0xff]
    %v462 = vld [vmem:[#allocation2 + $0x40] sm:$0xff]
    %v463 = vld [vmem:[#allocation2 + $0x80] sm:$0xff]
    %v464 = vld [vmem:[#allocation2 + $0xc0] sm:$0xff]
    %v465 = vld [vmem:[%s1] sm:$0xff]
    %v466 = vld [vmem:[%s1 + $0x8] sm:$0xff]
    %v467 = vld [vmem:[%s1 + $0x10] sm:$0xff]
    %v468 = vld [vmem:[%s1 + $0x18] sm:$0xff]
    %vm469 = vcmask 261120
    %v471 = vsel %vm469, %v465, 0
    %v474 = vsel %vm469, %v466, 0
    %v477 = vsel %vm469, %v467, 0
    %v480 = vsel %vm469, %v468, 0
    %482 = vmatprep.subr.mxu0 0.0
    %483 = vmatpush1.msra.mxu0 0.0
    %484 = vmatprep.subr.mxu0 0.0
    %485 = vmatpush1.msra.mxu0 0.0
    %486 = vmatprep.subr.mxu0 0.0
    %487 = vmatpush1.msra.mxu0 0.0
    %488 = vmatprep.subr.mxu0 0.0
    %489 = vmatpush1.msra.mxu0 0.0
    %490 = vmatprep.subr.mxu0 0.0
    %491 = vmatpush1.msra.mxu0 0.0
    %492 = vmatprep.subr.mxu0 0.0
    %493 = vmatpush1.msra.mxu0 0.0
    %494 = vmatprep.subr.mxu0 0.0
    %495 = vmatpush1.msra.mxu0 0.0
    %496 = vmatprep.subr.mxu0 0.0
    %497 = vmatpush1.msra.mxu0 0.0
    %498 = vmatprep.subr.mxu0 0.0
    %499 = vmatpush1.msra.mxu0 0.0
    %500 = vmatprep.subr.mxu0 0.0
    %501 = vmatpush1.msra.mxu0 0.0
    %502 = vmatprep.subr.mxu0 0.0
    %503 = vmatpush1.msra.mxu0 0.0
    %504 = vmatprep.subr.mxu0 0.0
    %505 = vmatpush1.msra.mxu0 0.0
    %506 = vmatprep.subr.mxu0 0.0
    %507 = vmatpush1.msra.mxu0 0.0
    %508 = vmatprep.subr.mxu0 0.0
    %509 = vmatpush1.msra.mxu0 0.0
    %510 = vmatprep.subr.mxu0 0.0
    %511 = vmatpush1.msra.mxu0 0.0
    %512 = vmatprep.subr.mxu0 0.0
    %513 = vmatpush1.msra.mxu0 0.0
    %514 = vmatprep.subr.mxu0 0.0
    %515 = vmatpush2.msra.mxu0 0.0
    %516 = vmatprep.subr.mxu0 0.0
    %517 = vmatpush2.msra.mxu0 0.0
    %518 = vmatprep.subr.mxu0 0.0
    %519 = vmatpush2.msra.mxu0 0.0
    %520 = vmatprep.subr.mxu0 0.0
    %521 = vmatpush2.msra.mxu0 0.0
    %522 = vmatprep.subr.mxu0 0.0
    %523 = vmatpush2.msra.mxu0 0.0
    %524 = vmatprep.subr.mxu0 0.0
    %525 = vmatpush2.msra.mxu0 0.0
    %526 = vmatprep.subr.mxu0 0.0
    %527 = vmatpush2.msra.mxu0 0.0
    %528 = vmatprep.subr.mxu0 0.0
    %529 = vmatpush2.msra.mxu0 0.0
    %530 = vmatprep.subr.mxu0 0.0
    %531 = vmatpush2.msra.mxu0 0.0
    %532 = vmatprep.subr.mxu0 0.0
    %533 = vmatpush2.msra.mxu0 0.0
    %534 = vmatprep.subr.mxu0 0.0
    %535 = vmatpush2.msra.mxu0 0.0
    %536 = vmatprep.subr.mxu0 0.0
    %537 = vmatpush2.msra.mxu0 0.0
    %538 = vmatprep.subr.mxu0 0.0
    %539 = vmatpush2.msra.mxu0 0.0
    %540 = vmatprep.subr.mxu0 0.0
    %541 = vmatpush2.msra.mxu0 0.0
    %542 = vmatprep.subr.mxu0 0.0
    %543 = vmatpush2.msra.mxu0 0.0
    %544 = vmatprep.subr.mxu0 0.0
    %545 = vmatpush2.msra.mxu0 0.0
    %546 = vmatprep.mubr.f32.mxu0 0.0
    %547 = vmatmul.mubr.f32.gmra.mxu0 %v471
    %v548 = vpop.f32.mrf.mxu0
    %v549 = vadd.f32 0.0, %v548
    %v550 = vpop.f32.mrf.mxu0
    %551 = vmatprep.mubr.f32.mxu0 0.0
    %552 = vmatmul.mubr.f32.gmra.mxu0 %v474
    %v553 = vpop.f32.mrf.mxu0
    %v554 = vadd.f32 0.0, %v553
    %v555 = vpop.f32.mrf.mxu0
    %556 = vmatprep.mubr.f32.mxu0 0.0
    %557 = vmatmul.mubr.f32.gmra.mxu0 %v477
    %v558 = vpop.f32.mrf.mxu0
    %v559 = vadd.f32 0.0, %v558
    %v560 = vpop.f32.mrf.mxu0
    %561 = vmatprep.mubr.f32.mxu0 0.0
    %562 = vmatmul.mubr.f32.gmra.mxu0 %v480
    %v563 = vpop.f32.mrf.mxu0
    %v564 = vadd.f32 0.0, %v563
    %v565 = vpop.f32.mrf.mxu0
    %566 = vdwg.mxu0
    %v567 = vadd.f32 %v461, %v549
    %v568 = vadd.f32 %v462, %v554
    %v569 = vadd.f32 %v463, %v559
    %v570 = vadd.f32 %v464, %v564
    %v571 = vtanh.pop %v567
    %v572 = vtanh.pop %v568
    %v573 = vtanh.pop %v569
    %v574 = vtanh.pop %v570
    %575 = vst [vmem:[#allocation6] sm:$0xff] %v571
    %576 = vst [vmem:[#allocation6 + $0x8] sm:$0xff] %v572
    %577 = vst [vmem:[#allocation6 + $0x10] sm:$0xff] %v573
    %578 = vst [vmem:[#allocation6 + $0x18] sm:$0xff] %v574
    %s579 = scalar_lea.vmem [#allocation2], 8
    %v580 = vld [vmem:[%s579] sm:$0xff]
    %v581 = vld [vmem:[%s579 + $0x40] sm:$0xff]
    %v582 = vld [vmem:[%s579 + $0x80] sm:$0xff]
    %v583 = vld [vmem:[%s579 + $0xc0] sm:$0xff]
    %v584 = vld [vmem:[%s1] sm:$0xff]
    %v585 = vld [vmem:[%s1 + $0x8] sm:$0xff]
    %v586 = vld [vmem:[%s1 + $0x10] sm:$0xff]
    %v587 = vld [vmem:[%s1 + $0x18] sm:$0xff]
    %v589 = vsel %vm469, %v584, 0
    %v592 = vsel %vm469, %v585, 0
    %v595 = vsel %vm469, %v586, 0
    %v598 = vsel %vm469, %v587, 0
    %600 = vmatprep.subr.mxu0 0.0
    %601 = vmatpush1.msra.mxu0 0.0
    %602 = vmatprep.subr.mxu0 0.0
    %603 = vmatpush1.msra.mxu0 0.0
    %604 = vmatprep.subr.mxu0 0.0
    %605 = vmatpush1.msra.mxu0 0.0
    %606 = vmatprep.subr.mxu0 0.0
    %607 = vmatpush1.msra.mxu0 0.0
    %608 = vmatprep.subr.mxu0 0.0
    %609 = vmatpush1.msra.mxu0 0.0
    %610 = vmatprep.subr.mxu0 0.0
    %611 = vmatpush1.msra.mxu0 0.0
    %612 = vmatprep.subr.mxu0 0.0
    %613 = vmatpush1.msra.mxu0 0.0
    %614 = vmatprep.subr.mxu0 0.0
    %615 = vmatpush1.msra.mxu0 0.0
    %616 = vmatprep.subr.mxu0 0.0
    %617 = vmatpush1.msra.mxu0 0.0
    %618 = vmatprep.subr.mxu0 0.0
    %619 = vmatpush1.msra.mxu0 0.0
    %620 = vmatprep.subr.mxu0 0.0
    %621 = vmatpush1.msra.mxu0 0.0
    %622 = vmatprep.subr.mxu0 0.0
    %623 = vmatpush1.msra.mxu0 0.0
    %624 = vmatprep.subr.mxu0 0.0
    %625 = vmatpush1.msra.mxu0 %v574
    %626 = vmatprep.subr.mxu0 0.0
    %627 = vmatpush1.msra.mxu0 %v573
    %628 = vmatprep.subr.mxu0 0.0
    %629 = vmatpush1.msra.mxu0 %v572
    %630 = vmatprep.subr.mxu0 0.0
    %631 = vmatpush1.msra.mxu0 %v571
    %632 = vmatprep.subr.mxu0 0.0
    %633 = vmatpush2.msra.mxu0 0.0
    %634 = vmatprep.subr.mxu0 0.0
    %635 = vmatpush2.msra.mxu0 0.0
    %636 = vmatprep.subr.mxu0 0.0
    %637 = vmatpush2.msra.mxu0 0.0
    %638 = vmatprep.subr.mxu0 0.0
    %639 = vmatpush2.msra.mxu0 0.0
    %640 = vmatprep.subr.mxu0 0.0
    %641 = vmatpush2.msra.mxu0 0.0
    %642 = vmatprep.subr.mxu0 0.0
    %643 = vmatpush2.msra.mxu0 0.0
    %644 = vmatprep.subr.mxu0 0.0
    %645 = vmatpush2.msra.mxu0 0.0
    %646 = vmatprep.subr.mxu0 0.0
    %647 = vmatpush2.msra.mxu0 0.0
    %648 = vmatprep.subr.mxu0 0.0
    %649 = vmatpush2.msra.mxu0 0.0
    %650 = vmatprep.subr.mxu0 0.0
    %651 = vmatpush2.msra.mxu0 0.0
    %652 = vmatprep.subr.mxu0 0.0
    %653 = vmatpush2.msra.mxu0 0.0
    %654 = vmatprep.subr.mxu0 0.0
    %655 = vmatpush2.msra.mxu0 0.0
    %656 = vmatprep.subr.mxu0 0.0
    %657 = vmatpush2.msra.mxu0 0.0
    %658 = vmatprep.subr.mxu0 0.0
    %659 = vmatpush2.msra.mxu0 0.0
    %660 = vmatprep.subr.mxu0 0.0
    %661 = vmatpush2.msra.mxu0 0.0
    %662 = vmatprep.subr.mxu0 0.0
    %663 = vmatpush2.msra.mxu0 0.0
    %664 = vmatprep.mubr.f32.mxu0 0.0
    %665 = vmatmul.mubr.f32.gmra.mxu0 %v589
    %v666 = vpop.f32.mrf.mxu0
    %v667 = vadd.f32 0.0, %v666
    %v668 = vpop.f32.mrf.mxu0
    %669 = vmatprep.mubr.f32.mxu0 0.0
    %670 = vmatmul.mubr.f32.gmra.mxu0 %v592
    %v671 = vpop.f32.mrf.mxu0
    %v672 = vadd.f32 0.0, %v671
    %v673 = vpop.f32.mrf.mxu0
    %674 = vmatprep.mubr.f32.mxu0 0.0
    %675 = vmatmul.mubr.f32.gmra.mxu0 %v595
    %v676 = vpop.f32.mrf.mxu0
    %v677 = vadd.f32 0.0, %v676
    %v678 = vpop.f32.mrf.mxu0
    %679 = vmatprep.mubr.f32.mxu0 0.0
    %680 = vmatmul.mubr.f32.gmra.mxu0 %v598
    %v681 = vpop.f32.mrf.mxu0
    %v682 = vadd.f32 0.0, %v681
    %v683 = vpop.f32.mrf.mxu0
    %684 = vdwg.mxu0
    %v685 = vadd.f32 %v580, %v667
    %v686 = vadd.f32 %v581, %v672
    %v687 = vadd.f32 %v582, %v677
    %v688 = vadd.f32 %v583, %v682
    %v689 = vtanh.pop %v685
    %v690 = vtanh.pop %v686
    %v691 = vtanh.pop %v687
    %v692 = vtanh.pop %v688
    %s693 = scalar_lea.vmem [#allocation6], 32
    %694 = vst [vmem:[%s693] sm:$0xff] %v689
    %695 = vst [vmem:[%s693 + $0x8] sm:$0xff] %v690
    %696 = vst [vmem:[%s693 + $0x10] sm:$0xff] %v691
    %697 = vst [vmem:[%s693 + $0x18] sm:$0xff] %v692
    %s698 = scalar_lea.vmem [#allocation2], 16
    %v699 = vld [vmem:[%s698] sm:$0xff]
    %v700 = vld [vmem:[%s698 + $0x40] sm:$0xff]
    %v701 = vld [vmem:[%s698 + $0x80] sm:$0xff]
    %v702 = vld [vmem:[%s698 + $0xc0] sm:$0xff]
    %v703 = vld [vmem:[%s1] sm:$0xff]
    %v704 = vld [vmem:[%s1 + $0x8] sm:$0xff]
    %v705 = vld [vmem:[%s1 + $0x10] sm:$0xff]
    %v706 = vld [vmem:[%s1 + $0x18] sm:$0xff]
    %v708 = vsel %vm469, %v703, 0
    %v711 = vsel %vm469, %v704, 0
    %v714 = vsel %vm469, %v705, 0
    %v717 = vsel %vm469, %v706, 0
    %719 = vmatprep.subr.mxu0 0.0
    %720 = vmatpush1.msra.mxu0 0.0
    %721 = vmatprep.subr.mxu0 0.0
    %722 = vmatpush1.msra.mxu0 0.0
    %723 = vmatprep.subr.mxu0 0.0
    %724 = vmatpush1.msra.mxu0 0.0
    %725 = vmatprep.subr.mxu0 0.0
    %726 = vmatpush1.msra.mxu0 0.0
    %727 = vmatprep.subr.mxu0 0.0
    %728 = vmatpush1.msra.mxu0 0.0
    %729 = vmatprep.subr.mxu0 0.0
    %730 = vmatpush1.msra.mxu0 0.0
    %731 = vmatprep.subr.mxu0 0.0
    %732 = vmatpush1.msra.mxu0 0.0
    %733 = vmatprep.subr.mxu0 0.0
    %734 = vmatpush1.msra.mxu0 0.0
    %735 = vmatprep.subr.mxu0 0.0
    %736 = vmatpush1.msra.mxu0 0.0
    %737 = vmatprep.subr.mxu0 0.0
    %738 = vmatpush1.msra.mxu0 0.0
    %739 = vmatprep.subr.mxu0 0.0
    %740 = vmatpush1.msra.mxu0 0.0
    %741 = vmatprep.subr.mxu0 0.0
    %742 = vmatpush1.msra.mxu0 0.0
    %743 = vmatprep.subr.mxu0 0.0
    %744 = vmatpush1.msra.mxu0 %v692
    %745 = vmatprep.subr.mxu0 0.0
    %746 = vmatpush1.msra.mxu0 %v691
    %747 = vmatprep.subr.mxu0 0.0
    %748 = vmatpush1.msra.mxu0 %v690
    %749 = vmatprep.subr.mxu0 0.0
    %750 = vmatpush1.msra.mxu0 %v689
    %751 = vmatprep.subr.mxu0 0.0
    %752 = vmatpush2.msra.mxu0 0.0
    %753 = vmatprep.subr.mxu0 0.0
    %754 = vmatpush2.msra.mxu0 0.0
    %755 = vmatprep.subr.mxu0 0.0
    %756 = vmatpush2.msra.mxu0 0.0
    %757 = vmatprep.subr.mxu0 0.0
    %758 = vmatpush2.msra.mxu0 0.0
    %759 = vmatprep.subr.mxu0 0.0
    %760 = vmatpush2.msra.mxu0 0.0
    %761 = vmatprep.subr.mxu0 0.0
    %762 = vmatpush2.msra.mxu0 0.0
    %763 = vmatprep.subr.mxu0 0.0
    %764 = vmatpush2.msra.mxu0 0.0
    %765 = vmatprep.subr.mxu0 0.0
    %766 = vmatpush2.msra.mxu0 0.0
    %767 = vmatprep.subr.mxu0 0.0
    %768 = vmatpush2.msra.mxu0 0.0
    %769 = vmatprep.subr.mxu0 0.0
    %770 = vmatpush2.msra.mxu0 0.0
    %771 = vmatprep.subr.mxu0 0.0
    %772 = vmatpush2.msra.mxu0 0.0
    %773 = vmatprep.subr.mxu0 0.0
    %774 = vmatpush2.msra.mxu0 0.0
    %775 = vmatprep.subr.mxu0 0.0
    %776 = vmatpush2.msra.mxu0 0.0
    %777 = vmatprep.subr.mxu0 0.0
    %778 = vmatpush2.msra.mxu0 0.0
    %779 = vmatprep.subr.mxu0 0.0
    %780 = vmatpush2.msra.mxu0 0.0
    %781 = vmatprep.subr.mxu0 0.0
    %782 = vmatpush2.msra.mxu0 0.0
    %783 = vmatprep.mubr.f32.mxu0 0.0
    %784 = vmatmul.mubr.f32.gmra.mxu0 %v708
    %v785 = vpop.f32.mrf.mxu0
    %v786 = vadd.f32 0.0, %v785
    %v787 = vpop.f32.mrf.mxu0
    %788 = vmatprep.mubr.f32.mxu0 0.0
    %789 = vmatmul.mubr.f32.gmra.mxu0 %v711
    %v790 = vpop.f32.mrf.mxu0
    %v791 = vadd.f32 0.0, %v790
    %v792 = vpop.f32.mrf.mxu0
    %793 = vmatprep.mubr.f32.mxu0 0.0
    %794 = vmatmul.mubr.f32.gmra.mxu0 %v714
    %v795 = vpop.f32.mrf.mxu0
    %v796 = vadd.f32 0.0, %v795
    %v797 = vpop.f32.mrf.mxu0
    %798 = vmatprep.mubr.f32.mxu0 0.0
    %799 = vmatmul.mubr.f32.gmra.mxu0 %v717
    %v800 = vpop.f32.mrf.mxu0
    %v801 = vadd.f32 0.0, %v800
    %v802 = vpop.f32.mrf.mxu0
    %803 = vdwg.mxu0
    %v804 = vadd.f32 %v699, %v786
    %v805 = vadd.f32 %v700, %v791
    %v806 = vadd.f32 %v701, %v796
    %v807 = vadd.f32 %v702, %v801
    %v808 = vtanh.pop %v804
    %v809 = vtanh.pop %v805
    %v810 = vtanh.pop %v806
    %v811 = vtanh.pop %v807
    %s812 = scalar_lea.vmem [#allocation6], 64
    %813 = vst [vmem:[%s812] sm:$0xff] %v808
    %814 = vst [vmem:[%s812 + $0x8] sm:$0xff] %v809
    %815 = vst [vmem:[%s812 + $0x10] sm:$0xff] %v810
    %816 = vst [vmem:[%s812 + $0x18] sm:$0xff] %v811
    %s817 = scalar_lea.vmem [#allocation2], 24
    %v818 = vld [vmem:[%s817] sm:$0xff]
    %v819 = vld [vmem:[%s817 + $0x40] sm:$0xff]
    %v820 = vld [vmem:[%s817 + $0x80] sm:$0xff]
    %v821 = vld [vmem:[%s817 + $0xc0] sm:$0xff]
    %v822 = vld [vmem:[%s1] sm:$0xff]
    %v823 = vld [vmem:[%s1 + $0x8] sm:$0xff]
    %v824 = vld [vmem:[%s1 + $0x10] sm:$0xff]
    %v825 = vld [vmem:[%s1 + $0x18] sm:$0xff]
    %v827 = vsel %vm469, %v822, 0
    %v830 = vsel %vm469, %v823, 0
    %v833 = vsel %vm469, %v824, 0
    %v836 = vsel %vm469, %v825, 0
    %838 = vmatprep.subr.mxu0 0.0
    %839 = vmatpush1.msra.mxu0 0.0
    %840 = vmatprep.subr.mxu0 0.0
    %841 = vmatpush1.msra.mxu0 0.0
    %842 = vmatprep.subr.mxu0 0.0
    %843 = vmatpush1.msra.mxu0 0.0
    %844 = vmatprep.subr.mxu0 0.0
    %845 = vmatpush1.msra.mxu0 0.0
    %846 = vmatprep.subr.mxu0 0.0
    %847 = vmatpush1.msra.mxu0 0.0
    %848 = vmatprep.subr.mxu0 0.0
    %849 = vmatpush1.msra.mxu0 0.0
    %850 = vmatprep.subr.mxu0 0.0
    %851 = vmatpush1.msra.mxu0 0.0
    %852 = vmatprep.subr.mxu0 0.0
    %853 = vmatpush1.msra.mxu0 0.0
    %854 = vmatprep.subr.mxu0 0.0
    %855 = vmatpush1.msra.mxu0 0.0
    %856 = vmatprep.subr.mxu0 0.0
    %857 = vmatpush1.msra.mxu0 0.0
    %858 = vmatprep.subr.mxu0 0.0
    %859 = vmatpush1.msra.mxu0 0.0
    %860 = vmatprep.subr.mxu0 0.0
    %861 = vmatpush1.msra.mxu0 0.0
    %862 = vmatprep.subr.mxu0 0.0
    %863 = vmatpush1.msra.mxu0 %v811
    %864 = vmatprep.subr.mxu0 0.0
    %865 = vmatpush1.msra.mxu0 %v810
    %866 = vmatprep.subr.mxu0 0.0
    %867 = vmatpush1.msra.mxu0 %v809
    %868 = vmatprep.subr.mxu0 0.0
    %869 = vmatpush1.msra.mxu0 %v808
    %870 = vmatprep.subr.mxu0 0.0
    %871 = vmatpush2.msra.mxu0 0.0
    %872 = vmatprep.subr.mxu0 0.0
    %873 = vmatpush2.msra.mxu0 0.0
    %874 = vmatprep.subr.mxu0 0.0
    %875 = vmatpush2.msra.mxu0 0.0
    %876 = vmatprep.subr.mxu0 0.0
    %877 = vmatpush2.msra.mxu0 0.0
    %878 = vmatprep.subr.mxu0 0.0
    %879 = vmatpush2.msra.mxu0 0.0
    %880 = vmatprep.subr.mxu0 0.0
    %881 = vmatpush2.msra.mxu0 0.0
    %882 = vmatprep.subr.mxu0 0.0
    %883 = vmatpush2.msra.mxu0 0.0
    %884 = vmatprep.subr.mxu0 0.0
    %885 = vmatpush2.msra.mxu0 0.0
    %886 = vmatprep.subr.mxu0 0.0
    %887 = vmatpush2.msra.mxu0 0.0
    %888 = vmatprep.subr.mxu0 0.0
    %889 = vmatpush2.msra.mxu0 0.0
    %890 = vmatprep.subr.mxu0 0.0
    %891 = vmatpush2.msra.mxu0 0.0
    %892 = vmatprep.subr.mxu0 0.0
    %893 = vmatpush2.msra.mxu0 0.0
    %894 = vmatprep.subr.mxu0 0.0
    %895 = vmatpush2.msra.mxu0 0.0
    %896 = vmatprep.subr.mxu0 0.0
    %897 = vmatpush2.msra.mxu0 0.0
    %898 = vmatprep.subr.mxu0 0.0
    %899 = vmatpush2.msra.mxu0 0.0
    %900 = vmatprep.subr.mxu0 0.0
    %901 = vmatpush2.msra.mxu0 0.0
    %902 = vmatprep.mubr.f32.mxu0 0.0
    %903 = vmatmul.mubr.f32.gmra.mxu0 %v827
    %v904 = vpop.f32.mrf.mxu0
    %v905 = vadd.f32 0.0, %v904
    %v906 = vpop.f32.mrf.mxu0
    %907 = vmatprep.mubr.f32.mxu0 0.0
    %908 = vmatmul.mubr.f32.gmra.mxu0 %v830
    %v909 = vpop.f32.mrf.mxu0
    %v910 = vadd.f32 0.0, %v909
    %v911 = vpop.f32.mrf.mxu0
    %912 = vmatprep.mubr.f32.mxu0 0.0
    %913 = vmatmul.mubr.f32.gmra.mxu0 %v833
    %v914 = vpop.f32.mrf.mxu0
    %v915 = vadd.f32 0.0, %v914
    %v916 = vpop.f32.mrf.mxu0
    %917 = vmatprep.mubr.f32.mxu0 0.0
    %918 = vmatmul.mubr.f32.gmra.mxu0 %v836
    %v919 = vpop.f32.mrf.mxu0
    %v920 = vadd.f32 0.0, %v919
    %v921 = vpop.f32.mrf.mxu0
    %922 = vdwg.mxu0
    %v923 = vadd.f32 %v818, %v905
    %v924 = vadd.f32 %v819, %v910
    %v925 = vadd.f32 %v820, %v915
    %v926 = vadd.f32 %v821, %v920
    %v927 = vtanh.pop %v923
    %v928 = vtanh.pop %v924
    %v929 = vtanh.pop %v925
    %v930 = vtanh.pop %v926
    %s931 = scalar_lea.vmem [#allocation6], 96
    %932 = vst [vmem:[%s931] sm:$0xff] %v927
    %933 = vst [vmem:[%s931 + $0x8] sm:$0xff] %v928
    %934 = vst [vmem:[%s931 + $0x10] sm:$0xff] %v929
    %935 = vst [vmem:[%s931 + $0x18] sm:$0xff] %v930
    %s936 = scalar_lea.vmem [#allocation2], 32
    %v937 = vld [vmem:[%s936] sm:$0xff]
    %v938 = vld [vmem:[%s936 + $0x40] sm:$0xff]
    %v939 = vld [vmem:[%s936 + $0x80] sm:$0xff]
    %v940 = vld [vmem:[%s936 + $0xc0] sm:$0xff]
    %v941 = vld [vmem:[%s1] sm:$0xff]
    %v942 = vld [vmem:[%s1 + $0x8] sm:$0xff]
    %v943 = vld [vmem:[%s1 + $0x10] sm:$0xff]
    %v944 = vld [vmem:[%s1 + $0x18] sm:$0xff]
    %v946 = vsel %vm469, %v941, 0
    %v949 = vsel %vm469, %v942, 0
    %v952 = vsel %vm469, %v943, 0
    %v955 = vsel %vm469, %v944, 0
    %957 = vmatprep.subr.mxu0 0.0
    %958 = vmatpush1.msra.mxu0 0.0
    %959 = vmatprep.subr.mxu0 0.0
    %960 = vmatpush1.msra.mxu0 0.0
    %961 = vmatprep.subr.mxu0 0.0
    %962 = vmatpush1.msra.mxu0 0.0
    %963 = vmatprep.subr.mxu0 0.0
    %964 = vmatpush1.msra.mxu0 0.0
    %965 = vmatprep.subr.mxu0 0.0
    %966 = vmatpush1.msra.mxu0 0.0
    %967 = vmatprep.subr.mxu0 0.0
    %968 = vmatpush1.msra.mxu0 0.0
    %969 = vmatprep.subr.mxu0 0.0
    %970 = vmatpush1.msra.mxu0 0.0
    %971 = vmatprep.subr.mxu0 0.0
    %972 = vmatpush1.msra.mxu0 0.0
    %973 = vmatprep.subr.mxu0 0.0
    %974 = vmatpush1.msra.mxu0 0.0
    %975 = vmatprep.subr.mxu0 0.0
    %976 = vmatpush1.msra.mxu0 0.0
    %977 = vmatprep.subr.mxu0 0.0
    %978 = vmatpush1.msra.mxu0 0.0
    %979 = vmatprep.subr.mxu0 0.0
    %980 = vmatpush1.msra.mxu0 0.0
    %981 = vmatprep.subr.mxu0 0.0
    %982 = vmatpush1.msra.mxu0 %v930
    %983 = vmatprep.subr.mxu0 0.0
    %984 = vmatpush1.msra.mxu0 %v929
    %985 = vmatprep.subr.mxu0 0.0
    %986 = vmatpush1.msra.mxu0 %v928
    %987 = vmatprep.subr.mxu0 0.0
    %988 = vmatpush1.msra.mxu0 %v927
    %989 = vmatprep.subr.mxu0 0.0
    %990 = vmatpush2.msra.mxu0 0.0
    %991 = vmatprep.subr.mxu0 0.0
    %992 = vmatpush2.msra.mxu0 0.0
    %993 = vmatprep.subr.mxu0 0.0
    %994 = vmatpush2.msra.mxu0 0.0
    %995 = vmatprep.subr.mxu0 0.0
    %996 = vmatpush2.msra.mxu0 0.0
    %997 = vmatprep.subr.mxu0 0.0
    %998 = vmatpush2.msra.mxu0 0.0
    %999 = vmatprep.subr.mxu0 0.0
    %1000 = vmatpush2.msra.mxu0 0.0
    %1001 = vmatprep.subr.mxu0 0.0
    %1002 = vmatpush2.msra.mxu0 0.0
    %1003 = vmatprep.subr.mxu0 0.0
    %1004 = vmatpush2.msra.mxu0 0.0
    %1005 = vmatprep.subr.mxu0 0.0
    %1006 = vmatpush2.msra.mxu0 0.0
    %1007 = vmatprep.subr.mxu0 0.0
    %1008 = vmatpush2.msra.mxu0 0.0
    %1009 = vmatprep.subr.mxu0 0.0
    %1010 = vmatpush2.msra.mxu0 0.0
    %1011 = vmatprep.subr.mxu0 0.0
    %1012 = vmatpush2.msra.mxu0 0.0
    %1013 = vmatprep.subr.mxu0 0.0
    %1014 = vmatpush2.msra.mxu0 0.0
    %1015 = vmatprep.subr.mxu0 0.0
    %1016 = vmatpush2.msra.mxu0 0.0
    %1017 = vmatprep.subr.mxu0 0.0
    %1018 = vmatpush2.msra.mxu0 0.0
    %1019 = vmatprep.subr.mxu0 0.0
    %1020 = vmatpush2.msra.mxu0 0.0
    %1021 = vmatprep.mubr.f32.mxu0 0.0
    %1022 = vmatmul.mubr.f32.gmra.mxu0 %v946
    %v1023 = vpop.f32.mrf.mxu0
    %v1024 = vadd.f32 0.0, %v1023
    %v1025 = vpop.f32.mrf.mxu0
    %1026 = vmatprep.mubr.f32.mxu0 0.0
    %1027 = vmatmul.mubr.f32.gmra.mxu0 %v949
    %v1028 = vpop.f32.mrf.mxu0
    %v1029 = vadd.f32 0.0, %v1028
    %v1030 = vpop.f32.mrf.mxu0
    %1031 = vmatprep.mubr.f32.mxu0 0.0
    %1032 = vmatmul.mubr.f32.gmra.mxu0 %v952
    %v1033 = vpop.f32.mrf.mxu0
    %v1034 = vadd.f32 0.0, %v1033
    %v1035 = vpop.f32.mrf.mxu0
    %1036 = vmatprep.mubr.f32.mxu0 0.0
    %1037 = vmatmul.mubr.f32.gmra.mxu0 %v955
    %v1038 = vpop.f32.mrf.mxu0
    %v1039 = vadd.f32 0.0, %v1038
    %v1040 = vpop.f32.mrf.mxu0
    %1041 = vdwg.mxu0
    %v1042 = vadd.f32 %v937, %v1024
    %v1043 = vadd.f32 %v938, %v1029
    %v1044 = vadd.f32 %v939, %v1034
    %v1045 = vadd.f32 %v940, %v1039
    %v1046 = vtanh.pop %v1042
    %v1047 = vtanh.pop %v1043
    %v1048 = vtanh.pop %v1044
    %v1049 = vtanh.pop %v1045
    %s1050 = scalar_lea.vmem [#allocation6], 128
    %1051 = vst [vmem:[%s1050] sm:$0xff] %v1046
    %1052 = vst [vmem:[%s1050 + $0x8] sm:$0xff] %v1047
    %1053 = vst [vmem:[%s1050 + $0x10] sm:$0xff] %v1048
    %1054 = vst [vmem:[%s1050 + $0x18] sm:$0xff] %v1049
    %s1055 = scalar_lea.vmem [#allocation2], 40
    %v1056 = vld [vmem:[%s1055] sm:$0xff]
    %v1057 = vld [vmem:[%s1055 + $0x40] sm:$0xff]
    %v1058 = vld [vmem:[%s1055 + $0x80] sm:$0xff]
    %v1059 = vld [vmem:[%s1055 + $0xc0] sm:$0xff]
    %v1060 = vld [vmem:[%s1] sm:$0xff]
    %v1061 = vld [vmem:[%s1 + $0x8] sm:$0xff]
    %v1062 = vld [vmem:[%s1 + $0x10] sm:$0xff]
    %v1063 = vld [vmem:[%s1 + $0x18] sm:$0xff]
    %v1065 = vsel %vm469, %v1060, 0
    %v1068 = vsel %vm469, %v1061, 0
    %v1071 = vsel %vm469, %v1062, 0
    %v1074 = vsel %vm469, %v1063, 0
    %1076 = vmatprep.subr.mxu0 0.0
    %1077 = vmatpush1.msra.mxu0 0.0
    %1078 = vmatprep.subr.mxu0 0.0
    %1079 = vmatpush1.msra.mxu0 0.0
    %1080 = vmatprep.subr.mxu0 0.0
    %1081 = vmatpush1.msra.mxu0 0.0
    %1082 = vmatprep.subr.mxu0 0.0
    %1083 = vmatpush1.msra.mxu0 0.0
    %1084 = vmatprep.subr.mxu0 0.0
    %1085 = vmatpush1.msra.mxu0 0.0
    %1086 = vmatprep.subr.mxu0 0.0
    %1087 = vmatpush1.msra.mxu0 0.0
    %1088 = vmatprep.subr.mxu0 0.0
    %1089 = vmatpush1.msra.mxu0 0.0
    %1090 = vmatprep.subr.mxu0 0.0
    %1091 = vmatpush1.msra.mxu0 0.0
    %1092 = vmatprep.subr.mxu0 0.0
    %1093 = vmatpush1.msra.mxu0 0.0
    %1094 = vmatprep.subr.mxu0 0.0
    %1095 = vmatpush1.msra.mxu0 0.0
    %1096 = vmatprep.subr.mxu0 0.0
    %1097 = vmatpush1.msra.mxu0 0.0
    %1098 = vmatprep.subr.mxu0 0.0
    %1099 = vmatpush1.msra.mxu0 0.0
    %1100 = vmatprep.subr.mxu0 0.0
    %1101 = vmatpush1.msra.mxu0 %v1049
    %1102 = vmatprep.subr.mxu0 0.0
    %1103 = vmatpush1.msra.mxu0 %v1048
    %1104 = vmatprep.subr.mxu0 0.0
    %1105 = vmatpush1.msra.mxu0 %v1047
    %1106 = vmatprep.subr.mxu0 0.0
    %1107 = vmatpush1.msra.mxu0 %v1046
    %1108 = vmatprep.subr.mxu0 0.0
    %1109 = vmatpush2.msra.mxu0 0.0
    %1110 = vmatprep.subr.mxu0 0.0
    %1111 = vmatpush2.msra.mxu0 0.0
    %1112 = vmatprep.subr.mxu0 0.0
    %1113 = vmatpush2.msra.mxu0 0.0
    %1114 = vmatprep.subr.mxu0 0.0
    %1115 = vmatpush2.msra.mxu0 0.0
    %1116 = vmatprep.subr.mxu0 0.0
    %1117 = vmatpush2.msra.mxu0 0.0
    %1118 = vmatprep.subr.mxu0 0.0
    %1119 = vmatpush2.msra.mxu0 0.0
    %1120 = vmatprep.subr.mxu0 0.0
    %1121 = vmatpush2.msra.mxu0 0.0
    %1122 = vmatprep.subr.mxu0 0.0
    %1123 = vmatpush2.msra.mxu0 0.0
    %1124 = vmatprep.subr.mxu0 0.0
    %1125 = vmatpush2.msra.mxu0 0.0
    %1126 = vmatprep.subr.mxu0 0.0
    %1127 = vmatpush2.msra.mxu0 0.0
    %1128 = vmatprep.subr.mxu0 0.0
    %1129 = vmatpush2.msra.mxu0 0.0
    %1130 = vmatprep.subr.mxu0 0.0
    %1131 = vmatpush2.msra.mxu0 0.0
    %1132 = vmatprep.subr.mxu0 0.0
    %1133 = vmatpush2.msra.mxu0 0.0
    %1134 = vmatprep.subr.mxu0 0.0
    %1135 = vmatpush2.msra.mxu0 0.0
    %1136 = vmatprep.subr.mxu0 0.0
    %1137 = vmatpush2.msra.mxu0 0.0
    %1138 = vmatprep.subr.mxu0 0.0
    %1139 = vmatpush2.msra.mxu0 0.0
    %1140 = vmatprep.mubr.f32.mxu0 0.0
    %1141 = vmatmul.mubr.f32.gmra.mxu0 %v1065
    %v1142 = vpop.f32.mrf.mxu0
    %v1143 = vadd.f32 0.0, %v1142
    %v1144 = vpop.f32.mrf.mxu0
    %1145 = vmatprep.mubr.f32.mxu0 0.0
    %1146 = vmatmul.mubr.f32.gmra.mxu0 %v1068
    %v1147 = vpop.f32.mrf.mxu0
    %v1148 = vadd.f32 0.0, %v1147
    %v1149 = vpop.f32.mrf.mxu0
    %1150 = vmatprep.mubr.f32.mxu0 0.0
    %1151 = vmatmul.mubr.f32.gmra.mxu0 %v1071
    %v1152 = vpop.f32.mrf.mxu0
    %v1153 = vadd.f32 0.0, %v1152
    %v1154 = vpop.f32.mrf.mxu0
    %1155 = vmatprep.mubr.f32.mxu0 0.0
    %1156 = vmatmul.mubr.f32.gmra.mxu0 %v1074
    %v1157 = vpop.f32.mrf.mxu0
    %v1158 = vadd.f32 0.0, %v1157
    %v1159 = vpop.f32.mrf.mxu0
    %1160 = vdwg.mxu0
    %v1161 = vadd.f32 %v1056, %v1143
    %v1162 = vadd.f32 %v1057, %v1148
    %v1163 = vadd.f32 %v1058, %v1153
    %v1164 = vadd.f32 %v1059, %v1158
    %v1165 = vtanh.pop %v1161
    %v1166 = vtanh.pop %v1162
    %v1167 = vtanh.pop %v1163
    %v1168 = vtanh.pop %v1164
    %s1169 = scalar_lea.vmem [#allocation6], 160
    %1170 = vst [vmem:[%s1169] sm:$0xff] %v1165
    %1171 = vst [vmem:[%s1169 + $0x8] sm:$0xff] %v1166
    %1172 = vst [vmem:[%s1169 + $0x10] sm:$0xff] %v1167
    %1173 = vst [vmem:[%s1169 + $0x18] sm:$0xff] %v1168
    %s1174 = scalar_lea.vmem [#allocation2], 48
    %v1175 = vld [vmem:[%s1174] sm:$0xff]
    %v1176 = vld [vmem:[%s1174 + $0x40] sm:$0xff]
    %v1177 = vld [vmem:[%s1174 + $0x80] sm:$0xff]
    %v1178 = vld [vmem:[%s1174 + $0xc0] sm:$0xff]
    %v1179 = vld [vmem:[%s1] sm:$0xff]
    %v1180 = vld [vmem:[%s1 + $0x8] sm:$0xff]
    %v1181 = vld [vmem:[%s1 + $0x10] sm:$0xff]
    %v1182 = vld [vmem:[%s1 + $0x18] sm:$0xff]
    %v1184 = vsel %vm469, %v1179, 0
    %v1187 = vsel %vm469, %v1180, 0
    %v1190 = vsel %vm469, %v1181, 0
    %v1193 = vsel %vm469, %v1182, 0
    %1195 = vmatprep.subr.mxu0 0.0
    %1196 = vmatpush1.msra.mxu0 0.0
    %1197 = vmatprep.subr.mxu0 0.0
    %1198 = vmatpush1.msra.mxu0 0.0
    %1199 = vmatprep.subr.mxu0 0.0
    %1200 = vmatpush1.msra.mxu0 0.0
    %1201 = vmatprep.subr.mxu0 0.0
    %1202 = vmatpush1.msra.mxu0 0.0
    %1203 = vmatprep.subr.mxu0 0.0
    %1204 = vmatpush1.msra.mxu0 0.0
    %1205 = vmatprep.subr.mxu0 0.0
    %1206 = vmatpush1.msra.mxu0 0.0
    %1207 = vmatprep.subr.mxu0 0.0
    %1208 = vmatpush1.msra.mxu0 0.0
    %1209 = vmatprep.subr.mxu0 0.0
    %1210 = vmatpush1.msra.mxu0 0.0
    %1211 = vmatprep.subr.mxu0 0.0
    %1212 = vmatpush1.msra.mxu0 0.0
    %1213 = vmatprep.subr.mxu0 0.0
    %1214 = vmatpush1.msra.mxu0 0.0
    %1215 = vmatprep.subr.mxu0 0.0
    %1216 = vmatpush1.msra.mxu0 0.0
    %1217 = vmatprep.subr.mxu0 0.0
    %1218 = vmatpush1.msra.mxu0 0.0
    %1219 = vmatprep.subr.mxu0 0.0
    %1220 = vmatpush1.msra.mxu0 %v1168
    %1221 = vmatprep.subr.mxu0 0.0
    %1222 = vmatpush1.msra.mxu0 %v1167
    %1223 = vmatprep.subr.mxu0 0.0
    %1224 = vmatpush1.msra.mxu0 %v1166
    %1225 = vmatprep.subr.mxu0 0.0
    %1226 = vmatpush1.msra.mxu0 %v1165
    %1227 = vmatprep.subr.mxu0 0.0
    %1228 = vmatpush2.msra.mxu0 0.0
    %1229 = vmatprep.subr.mxu0 0.0
    %1230 = vmatpush2.msra.mxu0 0.0
    %1231 = vmatprep.subr.mxu0 0.0
    %1232 = vmatpush2.msra.mxu0 0.0
    %1233 = vmatprep.subr.mxu0 0.0
    %1234 = vmatpush2.msra.mxu0 0.0
    %1235 = vmatprep.subr.mxu0 0.0
    %1236 = vmatpush2.msra.mxu0 0.0
    %1237 = vmatprep.subr.mxu0 0.0
    %1238 = vmatpush2.msra.mxu0 0.0
    %1239 = vmatprep.subr.mxu0 0.0
    %1240 = vmatpush2.msra.mxu0 0.0
    %1241 = vmatprep.subr.mxu0 0.0
    %1242 = vmatpush2.msra.mxu0 0.0
    %1243 = vmatprep.subr.mxu0 0.0
    %1244 = vmatpush2.msra.mxu0 0.0
    %1245 = vmatprep.subr.mxu0 0.0
    %1246 = vmatpush2.msra.mxu0 0.0
    %1247 = vmatprep.subr.mxu0 0.0
    %1248 = vmatpush2.msra.mxu0 0.0
    %1249 = vmatprep.subr.mxu0 0.0
    %1250 = vmatpush2.msra.mxu0 0.0
    %1251 = vmatprep.subr.mxu0 0.0
    %1252 = vmatpush2.msra.mxu0 0.0
    %1253 = vmatprep.subr.mxu0 0.0
    %1254 = vmatpush2.msra.mxu0 0.0
    %1255 = vmatprep.subr.mxu0 0.0
    %1256 = vmatpush2.msra.mxu0 0.0
    %1257 = vmatprep.subr.mxu0 0.0
    %1258 = vmatpush2.msra.mxu0 0.0
    %1259 = vmatprep.mubr.f32.mxu0 0.0
    %1260 = vmatmul.mubr.f32.gmra.mxu0 %v1184
    %v1261 = vpop.f32.mrf.mxu0
    %v1262 = vadd.f32 0.0, %v1261
    %v1263 = vpop.f32.mrf.mxu0
    %1264 = vmatprep.mubr.f32.mxu0 0.0
    %1265 = vmatmul.mubr.f32.gmra.mxu0 %v1187
    %v1266 = vpop.f32.mrf.mxu0
    %v1267 = vadd.f32 0.0, %v1266
    %v1268 = vpop.f32.mrf.mxu0
    %1269 = vmatprep.mubr.f32.mxu0 0.0
    %1270 = vmatmul.mubr.f32.gmra.mxu0 %v1190
    %v1271 = vpop.f32.mrf.mxu0
    %v1272 = vadd.f32 0.0, %v1271
    %v1273 = vpop.f32.mrf.mxu0
    %1274 = vmatprep.mubr.f32.mxu0 0.0
    %1275 = vmatmul.mubr.f32.gmra.mxu0 %v1193
    %v1276 = vpop.f32.mrf.mxu0
    %v1277 = vadd.f32 0.0, %v1276
    %v1278 = vpop.f32.mrf.mxu0
    %1279 = vdwg.mxu0
    %v1280 = vadd.f32 %v1175, %v1262
    %v1281 = vadd.f32 %v1176, %v1267
    %v1282 = vadd.f32 %v1177, %v1272
    %v1283 = vadd.f32 %v1178, %v1277
    %v1284 = vtanh.pop %v1280
    %v1285 = vtanh.pop %v1281
    %v1286 = vtanh.pop %v1282
    %v1287 = vtanh.pop %v1283
    %s1288 = scalar_lea.vmem [#allocation6], 192
    %1289 = vst [vmem:[%s1288] sm:$0xff] %v1284
    %1290 = vst [vmem:[%s1288 + $0x8] sm:$0xff] %v1285
    %1291 = vst [vmem:[%s1288 + $0x10] sm:$0xff] %v1286
    %1292 = vst [vmem:[%s1288 + $0x18] sm:$0xff] %v1287
    %s1293 = scalar_lea.vmem [#allocation2], 56
    %v1294 = vld [vmem:[%s1293] sm:$0xff]
    %v1295 = vld [vmem:[%s1293 + $0x40] sm:$0xff]
    %v1296 = vld [vmem:[%s1293 + $0x80] sm:$0xff]
    %v1297 = vld [vmem:[%s1293 + $0xc0] sm:$0xff]
    %v1298 = vld [vmem:[%s1] sm:$0xff]
    %v1299 = vld [vmem:[%s1 + $0x8] sm:$0xff]
    %v1300 = vld [vmem:[%s1 + $0x10] sm:$0xff]
    %v1301 = vld [vmem:[%s1 + $0x18] sm:$0xff]
    %v1303 = vsel %vm469, %v1298, 0
    %v1306 = vsel %vm469, %v1299, 0
    %v1309 = vsel %vm469, %v1300, 0
    %v1312 = vsel %vm469, %v1301, 0
    %1314 = vmatprep.subr.mxu0 0.0
    %1315 = vmatpush1.msra.mxu0 0.0
    %1316 = vmatprep.subr.mxu0 0.0
    %1317 = vmatpush1.msra.mxu0 0.0
    %1318 = vmatprep.subr.mxu0 0.0
    %1319 = vmatpush1.msra.mxu0 0.0
    %1320 = vmatprep.subr.mxu0 0.0
    %1321 = vmatpush1.msra.mxu0 0.0
    %1322 = vmatprep.subr.mxu0 0.0
    %1323 = vmatpush1.msra.mxu0 0.0
    %1324 = vmatprep.subr.mxu0 0.0
    %1325 = vmatpush1.msra.mxu0 0.0
    %1326 = vmatprep.subr.mxu0 0.0
    %1327 = vmatpush1.msra.mxu0 0.0
    %1328 = vmatprep.subr.mxu0 0.0
    %1329 = vmatpush1.msra.mxu0 0.0
    %1330 = vmatprep.subr.mxu0 0.0
    %1331 = vmatpush1.msra.mxu0 0.0
    %1332 = vmatprep.subr.mxu0 0.0
    %1333 = vmatpush1.msra.mxu0 0.0
    %1334 = vmatprep.subr.mxu0 0.0
    %1335 = vmatpush1.msra.mxu0 0.0
    %1336 = vmatprep.subr.mxu0 0.0
    %1337 = vmatpush1.msra.mxu0 0.0
    %1338 = vmatprep.subr.mxu0 0.0
    %1339 = vmatpush1.msra.mxu0 %v1287
    %1340 = vmatprep.subr.mxu0 0.0
    %1341 = vmatpush1.msra.mxu0 %v1286
    %1342 = vmatprep.subr.mxu0 0.0
    %1343 = vmatpush1.msra.mxu0 %v1285
    %1344 = vmatprep.subr.mxu0 0.0
    %1345 = vmatpush1.msra.mxu0 %v1284
    %1346 = vmatprep.subr.mxu0 0.0
    %1347 = vmatpush2.msra.mxu0 0.0
    %1348 = vmatprep.subr.mxu0 0.0
    %1349 = vmatpush2.msra.mxu0 0.0
    %1350 = vmatprep.subr.mxu0 0.0
    %1351 = vmatpush2.msra.mxu0 0.0
    %1352 = vmatprep.subr.mxu0 0.0
    %1353 = vmatpush2.msra.mxu0 0.0
    %1354 = vmatprep.subr.mxu0 0.0
    %1355 = vmatpush2.msra.mxu0 0.0
    %1356 = vmatprep.subr.mxu0 0.0
    %1357 = vmatpush2.msra.mxu0 0.0
    %1358 = vmatprep.subr.mxu0 0.0
    %1359 = vmatpush2.msra.mxu0 0.0
    %1360 = vmatprep.subr.mxu0 0.0
    %1361 = vmatpush2.msra.mxu0 0.0
    %1362 = vmatprep.subr.mxu0 0.0
    %1363 = vmatpush2.msra.mxu0 0.0
    %1364 = vmatprep.subr.mxu0 0.0
    %1365 = vmatpush2.msra.mxu0 0.0
    %1366 = vmatprep.subr.mxu0 0.0
    %1367 = vmatpush2.msra.mxu0 0.0
    %1368 = vmatprep.subr.mxu0 0.0
    %1369 = vmatpush2.msra.mxu0 0.0
    %1370 = vmatprep.subr.mxu0 0.0
    %1371 = vmatpush2.msra.mxu0 0.0
    %1372 = vmatprep.subr.mxu0 0.0
    %1373 = vmatpush2.msra.mxu0 0.0
    %1374 = vmatprep.subr.mxu0 0.0
    %1375 = vmatpush2.msra.mxu0 0.0
    %1376 = vmatprep.subr.mxu0 0.0
    %1377 = vmatpush2.msra.mxu0 0.0
    %1378 = vmatprep.mubr.f32.mxu0 0.0
    %1379 = vmatmul.mubr.f32.gmra.mxu0 %v1303
    %v1380 = vpop.f32.mrf.mxu0
    %v1381 = vadd.f32 0.0, %v1380
    %v1382 = vpop.f32.mrf.mxu0
    %1383 = vmatprep.mubr.f32.mxu0 0.0
    %1384 = vmatmul.mubr.f32.gmra.mxu0 %v1306
    %v1385 = vpop.f32.mrf.mxu0
    %v1386 = vadd.f32 0.0, %v1385
    %v1387 = vpop.f32.mrf.mxu0
    %1388 = vmatprep.mubr.f32.mxu0 0.0
    %1389 = vmatmul.mubr.f32.gmra.mxu0 %v1309
    %v1390 = vpop.f32.mrf.mxu0
    %v1391 = vadd.f32 0.0, %v1390
    %v1392 = vpop.f32.mrf.mxu0
    %1393 = vmatprep.mubr.f32.mxu0 0.0
    %1394 = vmatmul.mubr.f32.gmra.mxu0 %v1312
    %v1395 = vpop.f32.mrf.mxu0
    %v1396 = vadd.f32 0.0, %v1395
    %v1397 = vpop.f32.mrf.mxu0
    %1398 = vdwg.mxu0
    %v1399 = vadd.f32 %v1294, %v1381
    %v1400 = vadd.f32 %v1295, %v1386
    %v1401 = vadd.f32 %v1296, %v1391
    %v1402 = vadd.f32 %v1297, %v1396
    %v1403 = vtanh.pop %v1399
    %v1404 = vtanh.pop %v1400
    %v1405 = vtanh.pop %v1401
    %v1406 = vtanh.pop %v1402
    %s1407 = scalar_lea.vmem [#allocation6], 224
    %1408 = vst [vmem:[%s1407] sm:$0xff] %v1403
    %1409 = vst [vmem:[%s1407 + $0x8] sm:$0xff] %v1404
    %1410 = vst [vmem:[%s1407 + $0x10] sm:$0xff] %v1405
    %1411 = vst [vmem:[%s1407 + $0x18] sm:$0xff] %v1406
    // Predicated region
    $region18: #{tpu_custom_call.1} parent=1 // pred_check
      _
    $region19: #{tpu_custom_call.1} parent=1 // pred_check_branch
      %1413 = sbr.rel (0) target = $region21
    $region20: #{tpu_custom_call.1} parent=1 // pred_region
      %s1415 = ssub.s32 4096, 4096
      %1416 = vsyncadd [#allocation5], %s1415
      %s1417 = sshll.u32 [#allocation6], 4
      %s1418 = int_to_ptr.vmem [resolvable:$true] %s1417
      %1423 = dma.vmem_to_hbm [thread:$0]  %s1418, 4096, %s3, [#allocation5], 128, 128, 8
    $region21: #{tpu_custom_call.1} parent=1 // pred_fallthru
      _
    // Predicated region
    $region22: #{tpu_custom_call.1} parent=1 // pred_check
      _
    $region23: #{tpu_custom_call.1} parent=1 // pred_check_branch
      %1425 = sbr.rel (0) target = $region25
    $region24: #{tpu_custom_call.1} parent=1 // pred_region
      %1426 = dma.done [#allocation5], 4096
    $region25: #{tpu_custom_call.1} parent=1 // pred_fallthru
      _
    %1427 = vsyncpa [#allocation4], 1
    %1428 = vsyncpa [#allocation5], 1

</llo_original>
